<compile_context>
chip_gen: v6e
topology: v6e:2x2x1
jax: 0.10.0
libtpu: 0.0.40
codegen_flags: <defaults>
</compile_context>

<pallas_src>
import jax
import jax.numpy as jnp
import numpy as np
from jax import lax
from jax.experimental import pallas as pl
from jax.experimental.pallas import tpu as pltpu


_EXPM_SCALING_STEPS = 4          # A -> A / 2**S, then square S times.
_LANES = 128                     # vreg / MXU lane width.
_VMEM_LIMIT_BYTES = 32 << 20     # explicit scoped-VMEM request (safe v5e..v7x).
_VMEM_FOOTPRINT_BUDGET = 24 << 20  # keep estimated footprint under the limit.
_VMEM_FOOTPRINT_MULT = 14        # 3 I/O arrays x 2 pipeline bufs + ~8 f32 temps.


# ---------------------------------------------------------------------------
# Pallas kernel: one (Bt, Np, Np) batch tile of block-diagonally packed
# matrices per grid step.  Whole hot path (skew frame, expm, base @ E) runs
# on the MXU/VPU inside the kernel.
# ---------------------------------------------------------------------------
def _so_kernel(x_ref, base_ref, o_ref):
    bt, npk, _ = x_ref.shape

    def _f32(v):
        return v if v.dtype == jnp.float32 else v.astype(jnp.float32)

    def _bmm(a, b):
        return jnp.einsum("bij,bjk->bik", a, b,
                          preferred_element_type=jnp.float32)

    x = _f32(x_ref[...])                      # (Bt, Np, Np) packed inputs

    # --- constants, built once per batch tile (not per matrix / per term) ---
    row = lax.broadcasted_iota(jnp.int32, (npk, npk), 0)
    col = lax.broadcasted_iota(jnp.int32, (npk, npk), 1)
    lower = (row > col).astype(jnp.float32)
    eye_b = jnp.broadcast_to((row == col).astype(jnp.float32), (bt, npk, npk))

    # --- Skew.frame(X, lower=True):  A = tril(X, -1) - tril(X, -1)^T --------
    # Off-block entries of the packed input are exact zeros, so the global
    # strict-lower mask is equivalent to a per-block strict-lower mask.
    sl = x * lower
    a = sl - jnp.swapaxes(sl, -1, -2)

    # --- expm(A): scaling-and-squaring + degree-7 Taylor (Paterson-Stockmeyer)
    a_s = a * jnp.float32(1.0 / (2.0 ** _EXPM_SCALING_STEPS))
    a2 = _bmm(a_s, a_s)
    a3 = _bmm(a2, a_s)          # independent of a4 -> concurrent MXU chains
    a4 = _bmm(a2, a2)
    # E_s = (I + A + A^2/2 + A^3/6) + A^4 (I/24 + A/120 + A^2/720 + A^3/5040)
    p_lo = (eye_b + a_s
            + a2 * jnp.float32(1.0 / 2.0)
            + a3 * jnp.float32(1.0 / 6.0))
    p_hi = (eye_b * jnp.float32(1.0 / 24.0)
            + a_s * jnp.float32(1.0 / 120.0)
            + a2 * jnp.float32(1.0 / 720.0)
            + a3 * jnp.float32(1.0 / 5040.0))
    e = p_lo + _bmm(a4, p_hi)

    # Undo the scaling: square S times.
    for _ in range(_EXPM_SCALING_STEPS):
        e = _bmm(e, e)

    # --- base @ expm(A): base is only consumed here, read it at point of use.
    base = _f32(base_ref[...])
    o_ref[...] = _bmm(base, e).astype(o_ref.dtype)


# ---------------------------------------------------------------------------
# Wrapper: block-diagonal lane packing + batch tiling + pallas_call.
# ---------------------------------------------------------------------------
def _num_tensorcores():
    """TensorCores per chip (granularity of parallel-grid megacore sharding)."""
    try:
        kind = jax.devices()[0].device_kind.lower()
    except Exception:  # pragma: no cover - defensive
        return 1
    # v7x exposes 2 TensorCores per chip; v5e / v6e are single-TC.
    return 2 if ("v7" in kind or "7x" in kind) else 1


def so_forward_pallas(x, base, *, batch_tile=8):
    """x, base: (B, n, n) float32 (B = flattened tensorial_size)."""
    assert x.shape == base.shape and x.shape[-1] == x.shape[-2]
    B, n, _ = x.shape
    dtype = x.dtype

    # Lane packing factor: P matrices per (P*n, P*n) block-diagonal tile.
    P = max(1, _LANES // n)
    Np = P * n

    # --- batch-tile / grid sizing -------------------------------------------
    G = -(-B // P)                                  # packed groups
    block_bytes = Np * Np * 4
    bt_cap_vmem = max(1, _VMEM_FOOTPRINT_BUDGET
                      // (_VMEM_FOOTPRINT_MULT * block_bytes))
    bt_max = max(1, min(batch_tile, bt_cap_vmem, G))

    num_tc = _num_tensorcores()
    grid_len = -(-G // bt_max)
    if num_tc > 1 and G >= 2:
        # Keep the (parallel) grid a multiple of the TC count so the last
        # step does not leave one core idle on v7x.
        grid_len = max(grid_len, num_tc)
        grid_len = -(-grid_len // num_tc) * num_tc
    Bt = -(-G // grid_len)                          # rebalanced tile, <= bt_max
    G_pad = grid_len * Bt
    B_pad = G_pad * P

    # Pad the batch: zero X (-> expm = I) and identity base for padded slots.
    if B_pad > B:
        pad = B_pad - B
        x = jnp.concatenate([x, jnp.zeros((pad, n, n), dtype)], axis=0)
        base = jnp.concatenate(
            [base, jnp.broadcast_to(jnp.eye(n, dtype=dtype), (pad, n, n))],
            axis=0)

    # Block-diagonal packing via static slice-updates (no identity einsum).
    def pack(m):
        m = m.reshape(G_pad, P, n, n)
        out = jnp.zeros((G_pad, P, n, P, n), dtype)
        for p in range(P):
            upd = m[:, p][:, None, :, None, :]
            out = lax.dynamic_update_slice(out, upd, (0, p, 0, p, 0))
        return out.reshape(G_pad, Np, Np)

    xp = pack(x)
    bp = pack(base)

    out_p = pl.pallas_call(
        _so_kernel,
        out_shape=jax.ShapeDtypeStruct((G_pad, Np, Np), dtype),
        grid=(grid_len,),
        in_specs=[
            pl.BlockSpec((Bt, Np, Np), lambda i: (i, 0, 0)),
            pl.BlockSpec((Bt, Np, Np), lambda i: (i, 0, 0)),
        ],
        out_specs=pl.BlockSpec((Bt, Np, Np), lambda i: (i, 0, 0)),
        compiler_params=pltpu.CompilerParams(
            dimension_semantics=("parallel",),
            vmem_limit_bytes=_VMEM_LIMIT_BYTES),
    )(xp, bp)

    # Unpack: P static diagonal-block slices (no jnp.diagonal gather).
    y = out_p.reshape(G_pad, P, n, P, n)
    y = jnp.stack([y[:, p, :, p, :] for p in range(P)], axis=1)
    return y.reshape(B_pad, n, n)[:B]


# ---------------------------------------------------------------------------
# Plain-JAX glue: deterministic Haar-uniform orthogonal base (uniform_init_).
# ---------------------------------------------------------------------------
def uniform_init(key, shape, dtype=jnp.float32):
    """Haar-distributed orthogonal matrix; positive determinant when square."""
    n, k = shape[-2:]
    assert n == k, "SO base must be square"
    x = jax.random.normal(key, shape, dtype)
    q, r = jnp.linalg.qr(x)
    d = jnp.sign(jnp.diagonal(r, axis1=-2, axis2=-1))
    d = jnp.where(d == 0, jnp.ones_like(d), d)
    q = q * d[..., None, :]
    det = jnp.linalg.det(q)
    mask = jnp.where(det >= 0.0, 1.0, -1.0).astype(dtype)
    q = q.at[..., :, 0].multiply(mask[..., None])
    return q


class SO:
    """JAX/Pallas port of geotorch.SO (triv='expm', lower=True)."""
    # TODO(synk): cayley triv, right_inverse/in_manifold/sample not ported;
    # forward() (the hot path) only uses triv='expm'.

    def __init__(self, size, key):
        if len(size) < 2 or size[-1] != size[-2]:
            raise ValueError(f"SO needs a square last-two-dims size, got {size}")
        self.n = size[-1]
        self.tensorial_size = tuple(size[:-2])
        self.base = uniform_init(key, self.tensorial_size + (self.n, self.n))

    def forward(self, x):
        b = int(np.prod(self.tensorial_size)) if self.tensorial_size else 1
        xf = x.reshape((b, self.n, self.n))
        bf = self.base.reshape((b, self.n, self.n))
        out = so_forward_pallas(xf, bf)
        return out.reshape(self.tensorial_size + (self.n, self.n))


# ---------------------------------------------------------------------------
if __name__ == "__main__":
    key = jax.random.PRNGKey(0)
    k_base, k_x = jax.random.split(key)

    # size = (batch=2, n=32, n=32): tensorial_size=(2,), n=32
    size = (2, 32, 32)
    so = SO(size, k_base)

    # Unconstrained input of the same shape as the base (as in forward()).
    x = 0.5 * jax.random.normal(k_x, size, jnp.float32)

    out = so.forward(x)
    out = jax.block_until_ready(out)

    # Sanity: output must be orthogonal (base in SO(n), expm(skew) in SO(n)).
    gram = jnp.einsum("bij,bik->bjk", out, out)
    eye = jnp.eye(size[-1], dtype=jnp.float32)
    err = float(jnp.max(jnp.abs(gram - eye)))
    assert err < 5e-3, f"orthogonality error too large: {err}"

    # Cross-check the in-kernel expm against jax.scipy.linalg.expm.
    low = jnp.tril(x, -1)
    a = low - jnp.swapaxes(low, -1, -2)
    ref = jnp.einsum("bij,bjk->bik", so.base, jax.scipy.linalg.expm(a))
    assert float(jnp.max(jnp.abs(out - ref))) < 1e-2

    print("KERNEL_OK")
</pallas_src>

<mosaic_0001>
module attributes {stable_mosaic.version = 11 : i64} {
  func.func @_so_kernel(%arg0: i32, %arg1: memref<1x128x128xf32, #tpu.memory_space<vmem>>, %arg2: memref<1x128x128xf32, #tpu.memory_space<vmem>>, %arg3: memref<1x128x128xf32, #tpu.memory_space<vmem>>) attributes {dimension_semantics = [#tpu.dimension_semantics<parallel>], iteration_bounds = array<i64: 1>, scalar_prefetch = 0 : i64, scratch_operands = 0 : i64, tpu.core_type = #tpu.core_type<tc>, window_params = [{transform_indices = @transform_0, window_bounds = array<i64: 1, 128, 128>}, {transform_indices = @transform_1, window_bounds = array<i64: 1, 128, 128>}, {transform_indices = @transform_2, window_bounds = array<i64: 1, 128, 128>}]} {
    %c0 = arith.constant 0 : index
    %c0_0 = arith.constant 0 : index
    %c0_1 = arith.constant 0 : index
    %0 = vector.load %arg1[%c0, %c0_0, %c0_1] : memref<1x128x128xf32, #tpu.memory_space<vmem>>, vector<1x128x128xf32>
    %1 = tpu.iota {dimensions = array<i32: 0>} : vector<128x128xi32>
    %2 = tpu.iota {dimensions = array<i32: 1>} : vector<128x128xi32>
    %3 = arith.cmpi sgt, %1, %2 : vector<128x128xi32>
    %4 = arith.extui %3 : vector<128x128xi1> to vector<128x128xi32>
    %5 = arith.sitofp %4 : vector<128x128xi32> to vector<128x128xf32>
    %6 = arith.cmpi eq, %1, %2 : vector<128x128xi32>
    %7 = arith.extui %6 : vector<128x128xi1> to vector<128x128xi32>
    %8 = arith.sitofp %7 : vector<128x128xi32> to vector<128x128xf32>
    %9 = vector.shape_cast %8 : vector<128x128xf32> to vector<1x128x128xf32>
    %10 = vector.shape_cast %5 : vector<128x128xf32> to vector<1x128x128xf32>
    %11 = arith.mulf %0, %10 : vector<1x128x128xf32>
    %12 = tpu.transpose %11, [0, 2, 1] : vector<1x128x128xf32> -> vector<1x128x128xf32>
    %13 = arith.subf %11, %12 : vector<1x128x128xf32>
    %cst = arith.constant 6.250000e-02 : f32
    %14 = vector.broadcast %cst : f32 to vector<1x128x128xf32>
    %15 = arith.mulf %13, %14 : vector<1x128x128xf32>
    "tpu.trace_start"() <{level = 10 : i32, message = "bij,bjk->bik"}> : () -> ()
    %cst_2 = arith.constant dense<0.000000e+00> : vector<1x128x128xf32>
    %16 = tpu.matmul %15, %15, %cst_2 {dimension_numbers = #tpu.dot_dimension_numbers<[2], [1], [1], [2], [0, 0, 0, 1, 1, 2], [0], [0]>} : vector<1x128x128xf32>, vector<1x128x128xf32>, vector<1x128x128xf32> -> vector<1x128x128xf32>
    %cst_3 = arith.constant dense<0.000000e+00> : vector<1x128x128xf32>
    %17 = tpu.matmul %16, %15, %cst_3 {dimension_numbers = #tpu.dot_dimension_numbers<[2], [1], [1], [2], [0, 0, 0, 1, 1, 2], [0], [0]>} : vector<1x128x128xf32>, vector<1x128x128xf32>, vector<1x128x128xf32> -> vector<1x128x128xf32>
    %cst_4 = arith.constant dense<0.000000e+00> : vector<1x128x128xf32>
    %18 = tpu.matmul %16, %16, %cst_4 {dimension_numbers = #tpu.dot_dimension_numbers<[2], [1], [1], [2], [0, 0, 0, 1, 1, 2], [0], [0]>} : vector<1x128x128xf32>, vector<1x128x128xf32>, vector<1x128x128xf32> -> vector<1x128x128xf32>
    "tpu.trace_stop"() : () -> ()
    %19 = arith.addf %9, %15 : vector<1x128x128xf32>
    %cst_5 = arith.constant 5.000000e-01 : f32
    %20 = vector.broadcast %cst_5 : f32 to vector<1x128x128xf32>
    %21 = arith.mulf %16, %20 : vector<1x128x128xf32>
    %22 = arith.addf %19, %21 : vector<1x128x128xf32>
    %cst_6 = arith.constant 0.166666672 : f32
    %23 = vector.broadcast %cst_6 : f32 to vector<1x128x128xf32>
    %24 = arith.mulf %17, %23 : vector<1x128x128xf32>
    %25 = arith.addf %22, %24 : vector<1x128x128xf32>
    %cst_7 = arith.constant 0.0416666679 : f32
    %26 = vector.broadcast %cst_7 : f32 to vector<1x128x128xf32>
    %27 = arith.mulf %9, %26 : vector<1x128x128xf32>
    %cst_8 = arith.constant 0.00833333377 : f32
    %28 = vector.broadcast %cst_8 : f32 to vector<1x128x128xf32>
    %29 = arith.mulf %15, %28 : vector<1x128x128xf32>
    %30 = arith.addf %27, %29 : vector<1x128x128xf32>
    %cst_9 = arith.constant 0.00138888892 : f32
    %31 = vector.broadcast %cst_9 : f32 to vector<1x128x128xf32>
    %32 = arith.mulf %16, %31 : vector<1x128x128xf32>
    %33 = arith.addf %30, %32 : vector<1x128x128xf32>
    %cst_10 = arith.constant 1.98412701E-4 : f32
    %34 = vector.broadcast %cst_10 : f32 to vector<1x128x128xf32>
    %35 = arith.mulf %17, %34 : vector<1x128x128xf32>
    %36 = arith.addf %33, %35 : vector<1x128x128xf32>
    "tpu.trace_start"() <{level = 10 : i32, message = "bij,bjk->bik"}> : () -> ()
    %cst_11 = arith.constant dense<0.000000e+00> : vector<1x128x128xf32>
    %37 = tpu.matmul %18, %36, %cst_11 {dimension_numbers = #tpu.dot_dimension_numbers<[2], [1], [1], [2], [0, 0, 0, 1, 1, 2], [0], [0]>} : vector<1x128x128xf32>, vector<1x128x128xf32>, vector<1x128x128xf32> -> vector<1x128x128xf32>
    "tpu.trace_stop"() : () -> ()
    %38 = arith.addf %25, %37 : vector<1x128x128xf32>
    "tpu.trace_start"() <{level = 10 : i32, message = "bij,bjk->bik"}> : () -> ()
    %cst_12 = arith.constant dense<0.000000e+00> : vector<1x128x128xf32>
    %39 = tpu.matmul %38, %38, %cst_12 {dimension_numbers = #tpu.dot_dimension_numbers<[2], [1], [1], [2], [0, 0, 0, 1, 1, 2], [0], [0]>} : vector<1x128x128xf32>, vector<1x128x128xf32>, vector<1x128x128xf32> -> vector<1x128x128xf32>
    %cst_13 = arith.constant dense<0.000000e+00> : vector<1x128x128xf32>
    %40 = tpu.matmul %39, %39, %cst_13 {dimension_numbers = #tpu.dot_dimension_numbers<[2], [1], [1], [2], [0, 0, 0, 1, 1, 2], [0], [0]>} : vector<1x128x128xf32>, vector<1x128x128xf32>, vector<1x128x128xf32> -> vector<1x128x128xf32>
    %cst_14 = arith.constant dense<0.000000e+00> : vector<1x128x128xf32>
    %41 = tpu.matmul %40, %40, %cst_14 {dimension_numbers = #tpu.dot_dimension_numbers<[2], [1], [1], [2], [0, 0, 0, 1, 1, 2], [0], [0]>} : vector<1x128x128xf32>, vector<1x128x128xf32>, vector<1x128x128xf32> -> vector<1x128x128xf32>
    %cst_15 = arith.constant dense<0.000000e+00> : vector<1x128x128xf32>
    %42 = tpu.matmul %41, %41, %cst_15 {dimension_numbers = #tpu.dot_dimension_numbers<[2], [1], [1], [2], [0, 0, 0, 1, 1, 2], [0], [0]>} : vector<1x128x128xf32>, vector<1x128x128xf32>, vector<1x128x128xf32> -> vector<1x128x128xf32>
    "tpu.trace_stop"() : () -> ()
    %c0_16 = arith.constant 0 : index
    %c0_17 = arith.constant 0 : index
    %c0_18 = arith.constant 0 : index
    %43 = vector.load %arg2[%c0_16, %c0_17, %c0_18] : memref<1x128x128xf32, #tpu.memory_space<vmem>>, vector<1x128x128xf32>
    "tpu.trace_start"() <{level = 10 : i32, message = "bij,bjk->bik"}> : () -> ()
    %cst_19 = arith.constant dense<0.000000e+00> : vector<1x128x128xf32>
    %44 = tpu.matmul %43, %42, %cst_19 {dimension_numbers = #tpu.dot_dimension_numbers<[2], [1], [1], [2], [0, 0, 0, 1, 1, 2], [0], [0]>} : vector<1x128x128xf32>, vector<1x128x128xf32>, vector<1x128x128xf32> -> vector<1x128x128xf32>
    "tpu.trace_stop"() : () -> ()
    %c0_20 = arith.constant 0 : index
    %c0_21 = arith.constant 0 : index
    %c0_22 = arith.constant 0 : index
    %45 = vector.load %arg3[%c0_20, %c0_21, %c0_22] : memref<1x128x128xf32, #tpu.memory_space<vmem>>, vector<1x128x128xf32>
    tpu.vector_store %arg3[%c0_20, %c0_21, %c0_22], %44 {strides = array<i32>} : memref<1x128x128xf32, #tpu.memory_space<vmem>>, vector<1x128x128xf32>,
    return
  }
  func.func @transform_0(%arg0: i32) -> (i32, i32, i32) {
    %c0_i32 = arith.constant 0 : i32
    %c0_i32_0 = arith.constant 0 : i32
    %c0_i32_1 = arith.constant 0 : i32
    return %arg0, %c0_i32, %c0_i32_0 : i32, i32, i32
  }
  func.func @transform_1(%arg0: i32) -> (i32, i32, i32) {
    %c0_i32 = arith.constant 0 : i32
    %c0_i32_0 = arith.constant 0 : i32
    %c0_i32_1 = arith.constant 0 : i32
    return %arg0, %c0_i32, %c0_i32_0 : i32, i32, i32
  }
  func.func @transform_2(%arg0: i32) -> (i32, i32, i32) {
    %c0_i32 = arith.constant 0 : i32
    %c0_i32_0 = arith.constant 0 : i32
    %c0_i32_1 = arith.constant 0 : i32
    return %arg0, %c0_i32, %c0_i32_0 : i32, i32, i32
  }
}

</mosaic_0001>

<llo_original>
// kernel: tpu_custom_call.1
$region0: #{tpu_custom_call.1}
  #allocation0 [shape = 'u32[]', space=smem, size = 0x4, offset = 0x4, fixed_abs, tag = 'smem constant byte address 0x4 - core index']
  #allocation1 [shape = 'u32[144,128]{1,0:T(1,128)}', space=vmem, size = 0x12000, scoped, tag = 'internal scratch']
  %s0 = inlined_call_operand.hbm [shape: f32[1,128,128], index: 0, kind: input, shape index: {}]
  %s1 = inlined_call_operand.hbm [shape: f32[1,128,128], index: 1, kind: input, shape index: {}]
  %s2 = inlined_call_operand.hbm [shape: f32[1,128,128], index: 2, kind: output, shape index: {}]
  %s3 = sld [smem:[#allocation0]]
  $region26: #{tpu_custom_call.1} parent=0
    _
  %s5 = ssub.s32 1, %s3
  %s6 = scalar_select 0, %s5, %s3
  $region1: #{tpu_custom_call.1} parent=0
    #allocation2 [shape = 'u8[65536]{0}', space=vmem, size = 0x10000, scoped, tag = 'input window, operand 0, single buffered']
    #allocation3 [shape = 's32[1]{0}', space=sflag, size = 0x4, scoped, tag = 'scoped memory for tpu_custom_call.1']
    #allocation4 [shape = 's32[1]{0}', space=sflag, size = 0x4, scoped, tag = 'scoped memory for tpu_custom_call.1']
    #allocation5 [shape = 'u8[65536]{0}', space=vmem, size = 0x10000, scoped, tag = 'input window, operand 1, single buffered']
    #allocation6 [shape = 's32[1]{0}', space=sflag, size = 0x4, scoped, tag = 'scoped memory for tpu_custom_call.1']
    #allocation7 [shape = 'u8[65536]{0}', space=vmem, size = 0x10000, scoped, tag = 'output window, operand 0, single buffered']
    %7 = vsyncpa [#allocation3], 0
    %8 = vsyncpa [#allocation6], 0
    %9 = vsyncpa [#allocation4], 0
    // Predicated region
    $region2: #{tpu_custom_call.1} parent=1 // pred_check
      _
    $region3: #{tpu_custom_call.1} parent=1 // pred_check_branch
      %11 = sbr.rel (0) target = $region5
    $region4: #{tpu_custom_call.1} parent=1 // pred_region
      %s13 = ssub.s32 2048, 2048
      %14 = vsyncadd [#allocation3], %s13
      %s15 = sshll.u32 [#allocation2], 4
      %s16 = int_to_ptr.vmem [resolvable:$true] %s15
      %21 = dma.hbm_to_vmem [thread:$0]  %s0, 2048, %s16, [#allocation3], 128, 128, 8
    $region5: #{tpu_custom_call.1} parent=1 // pred_fallthru
      _
    // Predicated region
    $region6: #{tpu_custom_call.1} parent=1 // pred_check
      _
    $region7: #{tpu_custom_call.1} parent=1 // pred_check_branch
      %23 = sbr.rel (0) target = $region9
    $region8: #{tpu_custom_call.1} parent=1 // pred_region
      %s25 = ssub.s32 2048, 2048
      %26 = vsyncadd [#allocation6], %s25
      %s27 = sshll.u32 [#allocation5], 4
      %s28 = int_to_ptr.vmem [resolvable:$true] %s27
      %33 = dma.hbm_to_vmem [thread:$0]  %s1, 2048, %s28, [#allocation6], 128, 128, 8
    $region9: #{tpu_custom_call.1} parent=1 // pred_fallthru
      _
    // Predicated region
    $region10: #{tpu_custom_call.1} parent=1 // pred_check
      _
    $region11: #{tpu_custom_call.1} parent=1 // pred_check_branch
      %35 = sbr.rel (0) target = $region13
    $region12: #{tpu_custom_call.1} parent=1 // pred_region
      %36 = dma.done [#allocation3], 2048
    $region13: #{tpu_custom_call.1} parent=1 // pred_fallthru
      _
    // Predicated region
    $region14: #{tpu_custom_call.1} parent=1 // pred_check
      _
    $region15: #{tpu_custom_call.1} parent=1 // pred_check_branch
      %38 = sbr.rel (0) target = $region17
    $region16: #{tpu_custom_call.1} parent=1 // pred_region
      %39 = dma.done [#allocation6], 2048
    $region17: #{tpu_custom_call.1} parent=1 // pred_fallthru
      _
    %v40 = vld [vmem:[#allocation2] sm:$0xff]
    %v41 = vld [vmem:[#allocation2 + $0x8] sm:$0xff]
    %v42 = vld [vmem:[#allocation2 + $0x10] sm:$0xff]
    %v43 = vld [vmem:[#allocation2 + $0x18] sm:$0xff]
    %v44 = vld [vmem:[#allocation2 + $0x20] sm:$0xff]
    %v45 = vld [vmem:[#allocation2 + $0x28] sm:$0xff]
    %v46 = vld [vmem:[#allocation2 + $0x30] sm:$0xff]
    %v47 = vld [vmem:[#allocation2 + $0x38] sm:$0xff]
    %v48 = vld [vmem:[#allocation2 + $0x40] sm:$0xff]
    %v49 = vld [vmem:[#allocation2 + $0x48] sm:$0xff]
    %v50 = vld [vmem:[#allocation2 + $0x50] sm:$0xff]
    %v51 = vld [vmem:[#allocation2 + $0x58] sm:$0xff]
    %v52 = vld [vmem:[#allocation2 + $0x60] sm:$0xff]
    %v53 = vld [vmem:[#allocation2 + $0x68] sm:$0xff]
    %v54 = vld [vmem:[#allocation2 + $0x70] sm:$0xff]
    %v55 = vld [vmem:[#allocation2 + $0x78] sm:$0xff]
    %v56 = vlaneseq
    %v57 = vshrl.u32 %v56, 7
    %v58 = vadd.s32 %v57, 8
    %v59 = vadd.s32 %v57, 16
    %v60 = vadd.s32 %v57, 24
    %v61 = vadd.s32 %v57, 32
    %v62 = vadd.s32 %v57, 40
    %v63 = vadd.s32 %v57, 48
    %v64 = vadd.s32 %v57, 56
    %v65 = vadd.s32 %v57, 64
    %v66 = vadd.s32 %v57, 72
    %v67 = vadd.s32 %v57, 80
    %v68 = vadd.s32 %v57, 88
    %v69 = vadd.s32 %v57, 96
    %v70 = vadd.s32 %v57, 104
    %v71 = vadd.s32 %v57, 112
    %v72 = vadd.s32 %v57, 120
    %v73 = vlaneseq
    %v74 = vand.u32 %v73, 127
    %vm75 = vcmp.gt.s32.totalorder %v57, %v74
    %vm76 = vcmp.gt.s32.totalorder %v58, %v74
    %vm77 = vcmp.gt.s32.totalorder %v59, %v74
    %vm78 = vcmp.gt.s32.totalorder %v60, %v74
    %vm79 = vcmp.gt.s32.totalorder %v61, %v74
    %vm80 = vcmp.gt.s32.totalorder %v62, %v74
    %vm81 = vcmp.gt.s32.totalorder %v63, %v74
    %vm82 = vcmp.gt.s32.totalorder %v64, %v74
    %vm83 = vcmp.gt.s32.totalorder %v65, %v74
    %vm84 = vcmp.gt.s32.totalorder %v66, %v74
    %vm85 = vcmp.gt.s32.totalorder %v67, %v74
    %vm86 = vcmp.gt.s32.totalorder %v68, %v74
    %vm87 = vcmp.gt.s32.totalorder %v69, %v74
    %vm88 = vcmp.gt.s32.totalorder %v70, %v74
    %vm89 = vcmp.gt.s32.totalorder %v71, %v74
    %vm90 = vcmp.gt.s32.totalorder %v72, %v74
    %v91 = vsel %vm75, 1, 0
    %v92 = vsel %vm76, 1, 0
    %v93 = vsel %vm77, 1, 0
    %v94 = vsel %vm78, 1, 0
    %v95 = vsel %vm79, 1, 0
    %v96 = vsel %vm80, 1, 0
    %v97 = vsel %vm81, 1, 0
    %v98 = vsel %vm82, 1, 0
    %v99 = vsel %vm83, 1, 0
    %v100 = vsel %vm84, 1, 0
    %v101 = vsel %vm85, 1, 0
    %v102 = vsel %vm86, 1, 0
    %v103 = vsel %vm87, 1, 0
    %v104 = vsel %vm88, 1, 0
    %v105 = vsel %vm89, 1, 0
    %v106 = vsel %vm90, 1, 0
    %v107 = vcvt.s32.f32 %v91
    %v108 = vcvt.s32.f32 %v92
    %v109 = vcvt.s32.f32 %v93
    %v110 = vcvt.s32.f32 %v94
    %v111 = vcvt.s32.f32 %v95
    %v112 = vcvt.s32.f32 %v96
    %v113 = vcvt.s32.f32 %v97
    %v114 = vcvt.s32.f32 %v98
    %v115 = vcvt.s32.f32 %v99
    %v116 = vcvt.s32.f32 %v100
    %v117 = vcvt.s32.f32 %v101
    %v118 = vcvt.s32.f32 %v102
    %v119 = vcvt.s32.f32 %v103
    %v120 = vcvt.s32.f32 %v104
    %v121 = vcvt.s32.f32 %v105
    %v122 = vcvt.s32.f32 %v106
    %vm123 = vcmp.eq.s32.totalorder %v57, %v74
    %vm124 = vcmp.eq.s32.totalorder %v58, %v74
    %vm125 = vcmp.eq.s32.totalorder %v59, %v74
    %vm126 = vcmp.eq.s32.totalorder %v60, %v74
    %vm127 = vcmp.eq.s32.totalorder %v61, %v74
    %vm128 = vcmp.eq.s32.totalorder %v62, %v74
    %vm129 = vcmp.eq.s32.totalorder %v63, %v74
    %vm130 = vcmp.eq.s32.totalorder %v64, %v74
    %vm131 = vcmp.eq.s32.totalorder %v65, %v74
    %vm132 = vcmp.eq.s32.totalorder %v66, %v74
    %vm133 = vcmp.eq.s32.totalorder %v67, %v74
    %vm134 = vcmp.eq.s32.totalorder %v68, %v74
    %vm135 = vcmp.eq.s32.totalorder %v69, %v74
    %vm136 = vcmp.eq.s32.totalorder %v70, %v74
    %vm137 = vcmp.eq.s32.totalorder %v71, %v74
    %vm138 = vcmp.eq.s32.totalorder %v72, %v74
    %v139 = vsel %vm123, 1, 0
    %v140 = vsel %vm124, 1, 0
    %v141 = vsel %vm125, 1, 0
    %v142 = vsel %vm126, 1, 0
    %v143 = vsel %vm127, 1, 0
    %v144 = vsel %vm128, 1, 0
    %v145 = vsel %vm129, 1, 0
    %v146 = vsel %vm130, 1, 0
    %v147 = vsel %vm131, 1, 0
    %v148 = vsel %vm132, 1, 0
    %v149 = vsel %vm133, 1, 0
    %v150 = vsel %vm134, 1, 0
    %v151 = vsel %vm135, 1, 0
    %v152 = vsel %vm136, 1, 0
    %v153 = vsel %vm137, 1, 0
    %v154 = vsel %vm138, 1, 0
    %v155 = vcvt.s32.f32 %v139
    %v156 = vcvt.s32.f32 %v140
    %v157 = vcvt.s32.f32 %v141
    %v158 = vcvt.s32.f32 %v142
    %v159 = vcvt.s32.f32 %v143
    %v160 = vcvt.s32.f32 %v144
    %v161 = vcvt.s32.f32 %v145
    %v162 = vcvt.s32.f32 %v146
    %v163 = vcvt.s32.f32 %v147
    %v164 = vcvt.s32.f32 %v148
    %v165 = vcvt.s32.f32 %v149
    %v166 = vcvt.s32.f32 %v150
    %v167 = vcvt.s32.f32 %v151
    %v168 = vcvt.s32.f32 %v152
    %v169 = vcvt.s32.f32 %v153
    %v170 = vcvt.s32.f32 %v154
    %v171 = vmul.f32 %v40, %v107
    %v172 = vmul.f32 %v41, %v108
    %v173 = vmul.f32 %v42, %v109
    %v174 = vmul.f32 %v43, %v110
    %v175 = vmul.f32 %v44, %v111
    %v176 = vmul.f32 %v45, %v112
    %v177 = vmul.f32 %v46, %v113
    %v178 = vmul.f32 %v47, %v114
    %v179 = vmul.f32 %v48, %v115
    %v180 = vmul.f32 %v49, %v116
    %v181 = vmul.f32 %v50, %v117
    %v182 = vmul.f32 %v51, %v118
    %v183 = vmul.f32 %v52, %v119
    %v184 = vmul.f32 %v53, %v120
    %v185 = vmul.f32 %v54, %v121
    %v186 = vmul.f32 %v55, %v122
    %187 = vxpose.xlu0.b32.start [1/16] %v171, 128
    %188 = vxpose.xlu0.b32.cont [2/16] %v172, 128
    %189 = vxpose.xlu0.b32.cont [3/16] %v173, 128
    %190 = vxpose.xlu0.b32.cont [4/16] %v174, 128
    %191 = vxpose.xlu0.b32.cont [5/16] %v175, 128
    %192 = vxpose.xlu0.b32.cont [6/16] %v176, 128
    %193 = vxpose.xlu0.b32.cont [7/16] %v177, 128
    %194 = vxpose.xlu0.b32.cont [8/16] %v178, 128
    %195 = vxpose.xlu0.b32.cont [9/16] %v179, 128
    %196 = vxpose.xlu0.b32.cont [10/16] %v180, 128
    %197 = vxpose.xlu0.b32.cont [11/16] %v181, 128
    %198 = vxpose.xlu0.b32.cont [12/16] %v182, 128
    %199 = vxpose.xlu0.b32.cont [13/16] %v183, 128
    %200 = vxpose.xlu0.b32.cont [14/16] %v184, 128
    %201 = vxpose.xlu0.b32.cont [15/16] %v185, 128
    %202 = vxpose.xlu0.b32.end [16/16] %v186, 128
    %v203 = vpop.trf.xlu0
    %v204 = vpop.trf.xlu0
    %v205 = vpop.trf.xlu0
    %v206 = vpop.trf.xlu0
    %v207 = vpop.trf.xlu0
    %v208 = vpop.trf.xlu0
    %v209 = vpop.trf.xlu0
    %v210 = vpop.trf.xlu0
    %v211 = vpop.trf.xlu0
    %v212 = vpop.trf.xlu0
    %v213 = vpop.trf.xlu0
    %v214 = vpop.trf.xlu0
    %v215 = vpop.trf.xlu0
    %v216 = vpop.trf.xlu0
    %v217 = vpop.trf.xlu0
    %v218 = vpop.trf.xlu0
    %v219 = vsub.f32 %v171, %v203
    %v220 = vsub.f32 %v172, %v204
    %v221 = vsub.f32 %v173, %v205
    %v222 = vsub.f32 %v174, %v206
    %v223 = vsub.f32 %v175, %v207
    %v224 = vsub.f32 %v176, %v208
    %v225 = vsub.f32 %v177, %v209
    %v226 = vsub.f32 %v178, %v210
    %v227 = vsub.f32 %v179, %v211
    %v228 = vsub.f32 %v180, %v212
    %v229 = vsub.f32 %v181, %v213
    %v230 = vsub.f32 %v182, %v214
    %v231 = vsub.f32 %v183, %v215
    %v232 = vsub.f32 %v184, %v216
    %v233 = vsub.f32 %v185, %v217
    %v234 = vsub.f32 %v186, %v218
    %v235 = vmul.f32 %v219, 0.0625
    %v236 = vmul.f32 %v220, 0.0625
    %v237 = vmul.f32 %v221, 0.0625
    %v238 = vmul.f32 %v222, 0.0625
    %v239 = vmul.f32 %v223, 0.0625
    %v240 = vmul.f32 %v224, 0.0625
    %v241 = vmul.f32 %v225, 0.0625
    %v242 = vmul.f32 %v226, 0.0625
    %v243 = vmul.f32 %v227, 0.0625
    %v244 = vmul.f32 %v228, 0.0625
    %v245 = vmul.f32 %v229, 0.0625
    %v246 = vmul.f32 %v230, 0.0625
    %v247 = vmul.f32 %v231, 0.0625
    %v248 = vmul.f32 %v232, 0.0625
    %v249 = vmul.f32 %v233, 0.0625
    %v250 = vmul.f32 %v234, 0.0625
    %251 = vmatprep.subr.mxu0 0.0
    %252 = vmatpush1.msra.mxu0 %v250
    %253 = vmatprep.subr.mxu0 0.0
    %254 = vmatpush1.msra.mxu0 %v249
    %255 = vmatprep.subr.mxu0 0.0
    %256 = vmatpush1.msra.mxu0 %v248
    %257 = vmatprep.subr.mxu0 0.0
    %258 = vmatpush1.msra.mxu0 %v247
    %259 = vmatprep.subr.mxu0 0.0
    %260 = vmatpush1.msra.mxu0 %v246
    %261 = vmatprep.subr.mxu0 0.0
    %262 = vmatpush1.msra.mxu0 %v245
    %263 = vmatprep.subr.mxu0 0.0
    %264 = vmatpush1.msra.mxu0 %v244
    %265 = vmatprep.subr.mxu0 0.0
    %266 = vmatpush1.msra.mxu0 %v243
    %267 = vmatprep.subr.mxu0 0.0
    %268 = vmatpush1.msra.mxu0 %v242
    %269 = vmatprep.subr.mxu0 0.0
    %270 = vmatpush1.msra.mxu0 %v241
    %271 = vmatprep.subr.mxu0 0.0
    %272 = vmatpush1.msra.mxu0 %v240
    %273 = vmatprep.subr.mxu0 0.0
    %274 = vmatpush1.msra.mxu0 %v239
    %275 = vmatprep.subr.mxu0 0.0
    %276 = vmatpush1.msra.mxu0 %v238
    %277 = vmatprep.subr.mxu0 0.0
    %278 = vmatpush1.msra.mxu0 %v237
    %279 = vmatprep.subr.mxu0 0.0
    %280 = vmatpush1.msra.mxu0 %v236
    %281 = vmatprep.subr.mxu0 0.0
    %282 = vmatpush1.msra.mxu0 %v235
    %283 = vmatprep.subr.mxu0 0.0
    %284 = vmatpush2.msra.mxu0 0.0
    %285 = vmatprep.subr.mxu0 0.0
    %286 = vmatpush2.msra.mxu0 0.0
    %287 = vmatprep.subr.mxu0 0.0
    %288 = vmatpush2.msra.mxu0 0.0
    %289 = vmatprep.subr.mxu0 0.0
    %290 = vmatpush2.msra.mxu0 0.0
    %291 = vmatprep.subr.mxu0 0.0
    %292 = vmatpush2.msra.mxu0 0.0
    %293 = vmatprep.subr.mxu0 0.0
    %294 = vmatpush2.msra.mxu0 0.0
    %295 = vmatprep.subr.mxu0 0.0
    %296 = vmatpush2.msra.mxu0 0.0
    %297 = vmatprep.subr.mxu0 0.0
    %298 = vmatpush2.msra.mxu0 0.0
    %299 = vmatprep.subr.mxu0 0.0
    %300 = vmatpush2.msra.mxu0 0.0
    %301 = vmatprep.subr.mxu0 0.0
    %302 = vmatpush2.msra.mxu0 0.0
    %303 = vmatprep.subr.mxu0 0.0
    %304 = vmatpush2.msra.mxu0 0.0
    %305 = vmatprep.subr.mxu0 0.0
    %306 = vmatpush2.msra.mxu0 0.0
    %307 = vmatprep.subr.mxu0 0.0
    %308 = vmatpush2.msra.mxu0 0.0
    %309 = vmatprep.subr.mxu0 0.0
    %310 = vmatpush2.msra.mxu0 0.0
    %311 = vmatprep.subr.mxu0 0.0
    %312 = vmatpush2.msra.mxu0 0.0
    %313 = vmatprep.subr.mxu0 0.0
    %314 = vmatpush2.msra.mxu0 0.0
    %315 = vmatprep.mubr.f32.mxu0 0.0
    %316 = vmatmul.mubr.f32.gmra.mxu0 %v235
    %v317 = vpop.f32.mrf.mxu0
    %v318 = vadd.f32 0.0, %v317
    %v319 = vpop.f32.mrf.mxu0
    %320 = vmatprep.mubr.f32.mxu0 0.0
    %321 = vmatmul.mubr.f32.gmra.mxu0 %v236
    %v322 = vpop.f32.mrf.mxu0
    %v323 = vadd.f32 0.0, %v322
    %v324 = vpop.f32.mrf.mxu0
    %325 = vmatprep.mubr.f32.mxu0 0.0
    %326 = vmatmul.mubr.f32.gmra.mxu0 %v237
    %v327 = vpop.f32.mrf.mxu0
    %v328 = vadd.f32 0.0, %v327
    %v329 = vpop.f32.mrf.mxu0
    %330 = vmatprep.mubr.f32.mxu0 0.0
    %331 = vmatmul.mubr.f32.gmra.mxu0 %v238
    %v332 = vpop.f32.mrf.mxu0
    %v333 = vadd.f32 0.0, %v332
    %v334 = vpop.f32.mrf.mxu0
    %335 = vmatprep.mubr.f32.mxu0 0.0
    %336 = vmatmul.mubr.f32.gmra.mxu0 %v239
    %v337 = vpop.f32.mrf.mxu0
    %v338 = vadd.f32 0.0, %v337
    %v339 = vpop.f32.mrf.mxu0
    %340 = vmatprep.mubr.f32.mxu0 0.0
    %341 = vmatmul.mubr.f32.gmra.mxu0 %v240
    %v342 = vpop.f32.mrf.mxu0
    %v343 = vadd.f32 0.0, %v342
    %v344 = vpop.f32.mrf.mxu0
    %345 = vmatprep.mubr.f32.mxu0 0.0
    %346 = vmatmul.mubr.f32.gmra.mxu0 %v241
    %v347 = vpop.f32.mrf.mxu0
    %v348 = vadd.f32 0.0, %v347
    %v349 = vpop.f32.mrf.mxu0
    %350 = vmatprep.mubr.f32.mxu0 0.0
    %351 = vmatmul.mubr.f32.gmra.mxu0 %v242
    %v352 = vpop.f32.mrf.mxu0
    %v353 = vadd.f32 0.0, %v352
    %v354 = vpop.f32.mrf.mxu0
    %355 = vmatprep.mubr.f32.mxu0 0.0
    %356 = vmatmul.mubr.f32.gmra.mxu0 %v243
    %v357 = vpop.f32.mrf.mxu0
    %v358 = vadd.f32 0.0, %v357
    %v359 = vpop.f32.mrf.mxu0
    %360 = vmatprep.mubr.f32.mxu0 0.0
    %361 = vmatmul.mubr.f32.gmra.mxu0 %v244
    %v362 = vpop.f32.mrf.mxu0
    %v363 = vadd.f32 0.0, %v362
    %v364 = vpop.f32.mrf.mxu0
    %365 = vmatprep.mubr.f32.mxu0 0.0
    %366 = vmatmul.mubr.f32.gmra.mxu0 %v245
    %v367 = vpop.f32.mrf.mxu0
    %v368 = vadd.f32 0.0, %v367
    %v369 = vpop.f32.mrf.mxu0
    %370 = vmatprep.mubr.f32.mxu0 0.0
    %371 = vmatmul.mubr.f32.gmra.mxu0 %v246
    %v372 = vpop.f32.mrf.mxu0
    %v373 = vadd.f32 0.0, %v372
    %v374 = vpop.f32.mrf.mxu0
    %375 = vmatprep.mubr.f32.mxu0 0.0
    %376 = vmatmul.mubr.f32.gmra.mxu0 %v247
    %v377 = vpop.f32.mrf.mxu0
    %v378 = vadd.f32 0.0, %v377
    %v379 = vpop.f32.mrf.mxu0
    %380 = vmatprep.mubr.f32.mxu0 0.0
    %381 = vmatmul.mubr.f32.gmra.mxu0 %v248
    %v382 = vpop.f32.mrf.mxu0
    %v383 = vadd.f32 0.0, %v382
    %v384 = vpop.f32.mrf.mxu0
    %385 = vmatprep.mubr.f32.mxu0 0.0
    %386 = vmatmul.mubr.f32.gmra.mxu0 %v249
    %v387 = vpop.f32.mrf.mxu0
    %v388 = vadd.f32 0.0, %v387
    %v389 = vpop.f32.mrf.mxu0
    %390 = vmatprep.mubr.f32.mxu0 0.0
    %391 = vmatmul.mubr.f32.gmra.mxu0 %v250
    %v392 = vpop.f32.mrf.mxu0
    %v393 = vadd.f32 0.0, %v392
    %v394 = vpop.f32.mrf.mxu0
    %395 = vdwg.mxu0
    %396 = vmatprep.subr.mxu0 0.0
    %397 = vmatpush1.msra.mxu0 %v250
    %398 = vmatprep.subr.mxu0 0.0
    %399 = vmatpush1.msra.mxu0 %v249
    %400 = vmatprep.subr.mxu0 0.0
    %401 = vmatpush1.msra.mxu0 %v248
    %402 = vmatprep.subr.mxu0 0.0
    %403 = vmatpush1.msra.mxu0 %v247
    %404 = vmatprep.subr.mxu0 0.0
    %405 = vmatpush1.msra.mxu0 %v246
    %406 = vmatprep.subr.mxu0 0.0
    %407 = vmatpush1.msra.mxu0 %v245
    %408 = vmatprep.subr.mxu0 0.0
    %409 = vmatpush1.msra.mxu0 %v244
    %410 = vmatprep.subr.mxu0 0.0
    %411 = vmatpush1.msra.mxu0 %v243
    %412 = vmatprep.subr.mxu0 0.0
    %413 = vmatpush1.msra.mxu0 %v242
    %414 = vmatprep.subr.mxu0 0.0
    %415 = vmatpush1.msra.mxu0 %v241
    %416 = vmatprep.subr.mxu0 0.0
    %417 = vmatpush1.msra.mxu0 %v240
    %418 = vmatprep.subr.mxu0 0.0
    %419 = vmatpush1.msra.mxu0 %v239
    %420 = vmatprep.subr.mxu0 0.0
    %421 = vmatpush1.msra.mxu0 %v238
    %422 = vmatprep.subr.mxu0 0.0
    %423 = vmatpush1.msra.mxu0 %v237
    %424 = vmatprep.subr.mxu0 0.0
    %425 = vmatpush1.msra.mxu0 %v236
    %426 = vmatprep.subr.mxu0 0.0
    %427 = vmatpush1.msra.mxu0 %v235
    %428 = vmatprep.subr.mxu0 0.0
    %429 = vmatpush2.msra.mxu0 0.0
    %430 = vmatprep.subr.mxu0 0.0
    %431 = vmatpush2.msra.mxu0 0.0
    %432 = vmatprep.subr.mxu0 0.0
    %433 = vmatpush2.msra.mxu0 0.0
    %434 = vmatprep.subr.mxu0 0.0
    %435 = vmatpush2.msra.mxu0 0.0
    %436 = vmatprep.subr.mxu0 0.0
    %437 = vmatpush2.msra.mxu0 0.0
    %438 = vmatprep.subr.mxu0 0.0
    %439 = vmatpush2.msra.mxu0 0.0
    %440 = vmatprep.subr.mxu0 0.0
    %441 = vmatpush2.msra.mxu0 0.0
    %442 = vmatprep.subr.mxu0 0.0
    %443 = vmatpush2.msra.mxu0 0.0
    %444 = vmatprep.subr.mxu0 0.0
    %445 = vmatpush2.msra.mxu0 0.0
    %446 = vmatprep.subr.mxu0 0.0
    %447 = vmatpush2.msra.mxu0 0.0
    %448 = vmatprep.subr.mxu0 0.0
    %449 = vmatpush2.msra.mxu0 0.0
    %450 = vmatprep.subr.mxu0 0.0
    %451 = vmatpush2.msra.mxu0 0.0
    %452 = vmatprep.subr.mxu0 0.0
    %453 = vmatpush2.msra.mxu0 0.0
    %454 = vmatprep.subr.mxu0 0.0
    %455 = vmatpush2.msra.mxu0 0.0
    %456 = vmatprep.subr.mxu0 0.0
    %457 = vmatpush2.msra.mxu0 0.0
    %458 = vmatprep.subr.mxu0 0.0
    %459 = vmatpush2.msra.mxu0 0.0
    %460 = vmatprep.mubr.f32.mxu0 0.0
    %461 = vmatmul.mubr.f32.gmra.mxu0 %v318
    %v462 = vpop.f32.mrf.mxu0
    %v463 = vadd.f32 0.0, %v462
    %v464 = vpop.f32.mrf.mxu0
    %465 = vmatprep.mubr.f32.mxu0 0.0
    %466 = vmatmul.mubr.f32.gmra.mxu0 %v323
    %v467 = vpop.f32.mrf.mxu0
    %v468 = vadd.f32 0.0, %v467
    %v469 = vpop.f32.mrf.mxu0
    %470 = vmatprep.mubr.f32.mxu0 0.0
    %471 = vmatmul.mubr.f32.gmra.mxu0 %v328
    %v472 = vpop.f32.mrf.mxu0
    %v473 = vadd.f32 0.0, %v472
    %v474 = vpop.f32.mrf.mxu0
    %475 = vmatprep.mubr.f32.mxu0 0.0
    %476 = vmatmul.mubr.f32.gmra.mxu0 %v333
    %v477 = vpop.f32.mrf.mxu0
    %v478 = vadd.f32 0.0, %v477
    %v479 = vpop.f32.mrf.mxu0
    %480 = vmatprep.mubr.f32.mxu0 0.0
    %481 = vmatmul.mubr.f32.gmra.mxu0 %v338
    %v482 = vpop.f32.mrf.mxu0
    %v483 = vadd.f32 0.0, %v482
    %v484 = vpop.f32.mrf.mxu0
    %485 = vmatprep.mubr.f32.mxu0 0.0
    %486 = vmatmul.mubr.f32.gmra.mxu0 %v343
    %v487 = vpop.f32.mrf.mxu0
    %v488 = vadd.f32 0.0, %v487
    %v489 = vpop.f32.mrf.mxu0
    %490 = vmatprep.mubr.f32.mxu0 0.0
    %491 = vmatmul.mubr.f32.gmra.mxu0 %v348
    %v492 = vpop.f32.mrf.mxu0
    %v493 = vadd.f32 0.0, %v492
    %v494 = vpop.f32.mrf.mxu0
    %495 = vmatprep.mubr.f32.mxu0 0.0
    %496 = vmatmul.mubr.f32.gmra.mxu0 %v353
    %v497 = vpop.f32.mrf.mxu0
    %v498 = vadd.f32 0.0, %v497
    %v499 = vpop.f32.mrf.mxu0
    %500 = vmatprep.mubr.f32.mxu0 0.0
    %501 = vmatmul.mubr.f32.gmra.mxu0 %v358
    %v502 = vpop.f32.mrf.mxu0
    %v503 = vadd.f32 0.0, %v502
    %v504 = vpop.f32.mrf.mxu0
    %505 = vmatprep.mubr.f32.mxu0 0.0
    %506 = vmatmul.mubr.f32.gmra.mxu0 %v363
    %v507 = vpop.f32.mrf.mxu0
    %v508 = vadd.f32 0.0, %v507
    %v509 = vpop.f32.mrf.mxu0
    %510 = vmatprep.mubr.f32.mxu0 0.0
    %511 = vmatmul.mubr.f32.gmra.mxu0 %v368
    %v512 = vpop.f32.mrf.mxu0
    %v513 = vadd.f32 0.0, %v512
    %v514 = vpop.f32.mrf.mxu0
    %515 = vmatprep.mubr.f32.mxu0 0.0
    %516 = vmatmul.mubr.f32.gmra.mxu0 %v373
    %v517 = vpop.f32.mrf.mxu0
    %v518 = vadd.f32 0.0, %v517
    %v519 = vpop.f32.mrf.mxu0
    %520 = vmatprep.mubr.f32.mxu0 0.0
    %521 = vmatmul.mubr.f32.gmra.mxu0 %v378
    %v522 = vpop.f32.mrf.mxu0
    %v523 = vadd.f32 0.0, %v522
    %v524 = vpop.f32.mrf.mxu0
    %525 = vmatprep.mubr.f32.mxu0 0.0
    %526 = vmatmul.mubr.f32.gmra.mxu0 %v383
    %v527 = vpop.f32.mrf.mxu0
    %v528 = vadd.f32 0.0, %v527
    %v529 = vpop.f32.mrf.mxu0
    %530 = vmatprep.mubr.f32.mxu0 0.0
    %531 = vmatmul.mubr.f32.gmra.mxu0 %v388
    %v532 = vpop.f32.mrf.mxu0
    %v533 = vadd.f32 0.0, %v532
    %v534 = vpop.f32.mrf.mxu0
    %535 = vmatprep.mubr.f32.mxu0 0.0
    %536 = vmatmul.mubr.f32.gmra.mxu0 %v393
    %v537 = vpop.f32.mrf.mxu0
    %v538 = vadd.f32 0.0, %v537
    %v539 = vpop.f32.mrf.mxu0
    %540 = vdwg.mxu0
    %541 = vmatprep.subr.mxu0 0.0
    %542 = vmatpush1.msra.mxu0 %v393
    %543 = vmatprep.subr.mxu0 0.0
    %544 = vmatpush1.msra.mxu0 %v388
    %545 = vmatprep.subr.mxu0 0.0
    %546 = vmatpush1.msra.mxu0 %v383
    %547 = vmatprep.subr.mxu0 0.0
    %548 = vmatpush1.msra.mxu0 %v378
    %549 = vmatprep.subr.mxu0 0.0
    %550 = vmatpush1.msra.mxu0 %v373
    %551 = vmatprep.subr.mxu0 0.0
    %552 = vmatpush1.msra.mxu0 %v368
    %553 = vmatprep.subr.mxu0 0.0
    %554 = vmatpush1.msra.mxu0 %v363
    %555 = vmatprep.subr.mxu0 0.0
    %556 = vmatpush1.msra.mxu0 %v358
    %557 = vmatprep.subr.mxu0 0.0
    %558 = vmatpush1.msra.mxu0 %v353
    %559 = vmatprep.subr.mxu0 0.0
    %560 = vmatpush1.msra.mxu0 %v348
    %561 = vmatprep.subr.mxu0 0.0
    %562 = vmatpush1.msra.mxu0 %v343
    %563 = vmatprep.subr.mxu0 0.0
    %564 = vmatpush1.msra.mxu0 %v338
    %565 = vmatprep.subr.mxu0 0.0
    %566 = vmatpush1.msra.mxu0 %v333
    %567 = vmatprep.subr.mxu0 0.0
    %568 = vmatpush1.msra.mxu0 %v328
    %569 = vmatprep.subr.mxu0 0.0
    %570 = vmatpush1.msra.mxu0 %v323
    %571 = vmatprep.subr.mxu0 0.0
    %572 = vmatpush1.msra.mxu0 %v318
    %573 = vmatprep.subr.mxu0 0.0
    %574 = vmatpush2.msra.mxu0 0.0
    %575 = vmatprep.subr.mxu0 0.0
    %576 = vmatpush2.msra.mxu0 0.0
    %577 = vmatprep.subr.mxu0 0.0
    %578 = vmatpush2.msra.mxu0 0.0
    %579 = vmatprep.subr.mxu0 0.0
    %580 = vmatpush2.msra.mxu0 0.0
    %581 = vmatprep.subr.mxu0 0.0
    %582 = vmatpush2.msra.mxu0 0.0
    %583 = vmatprep.subr.mxu0 0.0
    %584 = vmatpush2.msra.mxu0 0.0
    %585 = vmatprep.subr.mxu0 0.0
    %586 = vmatpush2.msra.mxu0 0.0
    %587 = vmatprep.subr.mxu0 0.0
    %588 = vmatpush2.msra.mxu0 0.0
    %589 = vmatprep.subr.mxu0 0.0
    %590 = vmatpush2.msra.mxu0 0.0
    %591 = vmatprep.subr.mxu0 0.0
    %592 = vmatpush2.msra.mxu0 0.0
    %593 = vmatprep.subr.mxu0 0.0
    %594 = vmatpush2.msra.mxu0 0.0
    %595 = vmatprep.subr.mxu0 0.0
    %596 = vmatpush2.msra.mxu0 0.0
    %597 = vmatprep.subr.mxu0 0.0
    %598 = vmatpush2.msra.mxu0 0.0
    %599 = vmatprep.subr.mxu0 0.0
    %600 = vmatpush2.msra.mxu0 0.0
    %601 = vmatprep.subr.mxu0 0.0
    %602 = vmatpush2.msra.mxu0 0.0
    %603 = vmatprep.subr.mxu0 0.0
    %604 = vmatpush2.msra.mxu0 0.0
    %605 = vmatprep.mubr.f32.mxu0 0.0
    %606 = vmatmul.mubr.f32.gmra.mxu0 %v318
    %v607 = vpop.f32.mrf.mxu0
    %v608 = vadd.f32 0.0, %v607
    %v609 = vpop.f32.mrf.mxu0
    %610 = vmatprep.mubr.f32.mxu0 0.0
    %611 = vmatmul.mubr.f32.gmra.mxu0 %v323
    %v612 = vpop.f32.mrf.mxu0
    %v613 = vadd.f32 0.0, %v612
    %v614 = vpop.f32.mrf.mxu0
    %615 = vmatprep.mubr.f32.mxu0 0.0
    %616 = vmatmul.mubr.f32.gmra.mxu0 %v328
    %v617 = vpop.f32.mrf.mxu0
    %v618 = vadd.f32 0.0, %v617
    %v619 = vpop.f32.mrf.mxu0
    %620 = vmatprep.mubr.f32.mxu0 0.0
    %621 = vmatmul.mubr.f32.gmra.mxu0 %v333
    %v622 = vpop.f32.mrf.mxu0
    %v623 = vadd.f32 0.0, %v622
    %v624 = vpop.f32.mrf.mxu0
    %625 = vmatprep.mubr.f32.mxu0 0.0
    %626 = vmatmul.mubr.f32.gmra.mxu0 %v338
    %v627 = vpop.f32.mrf.mxu0
    %v628 = vadd.f32 0.0, %v627
    %v629 = vpop.f32.mrf.mxu0
    %630 = vmatprep.mubr.f32.mxu0 0.0
    %631 = vmatmul.mubr.f32.gmra.mxu0 %v343
    %v632 = vpop.f32.mrf.mxu0
    %v633 = vadd.f32 0.0, %v632
    %v634 = vpop.f32.mrf.mxu0
    %635 = vmatprep.mubr.f32.mxu0 0.0
    %636 = vmatmul.mubr.f32.gmra.mxu0 %v348
    %v637 = vpop.f32.mrf.mxu0
    %v638 = vadd.f32 0.0, %v637
    %v639 = vpop.f32.mrf.mxu0
    %640 = vmatprep.mubr.f32.mxu0 0.0
    %641 = vmatmul.mubr.f32.gmra.mxu0 %v353
    %v642 = vpop.f32.mrf.mxu0
    %v643 = vadd.f32 0.0, %v642
    %v644 = vpop.f32.mrf.mxu0
    %645 = vmatprep.mubr.f32.mxu0 0.0
    %646 = vmatmul.mubr.f32.gmra.mxu0 %v358
    %v647 = vpop.f32.mrf.mxu0
    %v648 = vadd.f32 0.0, %v647
    %v649 = vpop.f32.mrf.mxu0
    %650 = vmatprep.mubr.f32.mxu0 0.0
    %651 = vmatmul.mubr.f32.gmra.mxu0 %v363
    %v652 = vpop.f32.mrf.mxu0
    %v653 = vadd.f32 0.0, %v652
    %v654 = vpop.f32.mrf.mxu0
    %655 = vmatprep.mubr.f32.mxu0 0.0
    %656 = vmatmul.mubr.f32.gmra.mxu0 %v368
    %v657 = vpop.f32.mrf.mxu0
    %v658 = vadd.f32 0.0, %v657
    %v659 = vpop.f32.mrf.mxu0
    %660 = vmatprep.mubr.f32.mxu0 0.0
    %661 = vmatmul.mubr.f32.gmra.mxu0 %v373
    %v662 = vpop.f32.mrf.mxu0
    %v663 = vadd.f32 0.0, %v662
    %v664 = vpop.f32.mrf.mxu0
    %665 = vmatprep.mubr.f32.mxu0 0.0
    %666 = vmatmul.mubr.f32.gmra.mxu0 %v378
    %v667 = vpop.f32.mrf.mxu0
    %v668 = vadd.f32 0.0, %v667
    %v669 = vpop.f32.mrf.mxu0
    %670 = vmatprep.mubr.f32.mxu0 0.0
    %671 = vmatmul.mubr.f32.gmra.mxu0 %v383
    %v672 = vpop.f32.mrf.mxu0
    %v673 = vadd.f32 0.0, %v672
    %v674 = vpop.f32.mrf.mxu0
    %675 = vmatprep.mubr.f32.mxu0 0.0
    %676 = vmatmul.mubr.f32.gmra.mxu0 %v388
    %v677 = vpop.f32.mrf.mxu0
    %v678 = vadd.f32 0.0, %v677
    %v679 = vpop.f32.mrf.mxu0
    %680 = vmatprep.mubr.f32.mxu0 0.0
    %681 = vmatmul.mubr.f32.gmra.mxu0 %v393
    %v682 = vpop.f32.mrf.mxu0
    %v683 = vadd.f32 0.0, %v682
    %v684 = vpop.f32.mrf.mxu0
    %685 = vdwg.mxu0
    %v686 = vadd.f32 %v155, %v235
    %v687 = vadd.f32 %v156, %v236
    %v688 = vadd.f32 %v157, %v237
    %v689 = vadd.f32 %v158, %v238
    %v690 = vadd.f32 %v159, %v239
    %v691 = vadd.f32 %v160, %v240
    %v692 = vadd.f32 %v161, %v241
    %v693 = vadd.f32 %v162, %v242
    %v694 = vadd.f32 %v163, %v243
    %v695 = vadd.f32 %v164, %v244
    %v696 = vadd.f32 %v165, %v245
    %v697 = vadd.f32 %v166, %v246
    %v698 = vadd.f32 %v167, %v247
    %v699 = vadd.f32 %v168, %v248
    %v700 = vadd.f32 %v169, %v249
    %v701 = vadd.f32 %v170, %v250
    %v702 = vmul.f32 %v318, 0.5
    %v703 = vmul.f32 %v323, 0.5
    %v704 = vmul.f32 %v328, 0.5
    %v705 = vmul.f32 %v333, 0.5
    %v706 = vmul.f32 %v338, 0.5
    %v707 = vmul.f32 %v343, 0.5
    %v708 = vmul.f32 %v348, 0.5
    %v709 = vmul.f32 %v353, 0.5
    %v710 = vmul.f32 %v358, 0.5
    %v711 = vmul.f32 %v363, 0.5
    %v712 = vmul.f32 %v368, 0.5
    %v713 = vmul.f32 %v373, 0.5
    %v714 = vmul.f32 %v378, 0.5
    %v715 = vmul.f32 %v383, 0.5
    %v716 = vmul.f32 %v388, 0.5
    %v717 = vmul.f32 %v393, 0.5
    %v718 = vadd.f32 %v686, %v702
    %v719 = vadd.f32 %v687, %v703
    %v720 = vadd.f32 %v688, %v704
    %v721 = vadd.f32 %v689, %v705
    %v722 = vadd.f32 %v690, %v706
    %v723 = vadd.f32 %v691, %v707
    %v724 = vadd.f32 %v692, %v708
    %v725 = vadd.f32 %v693, %v709
    %v726 = vadd.f32 %v694, %v710
    %v727 = vadd.f32 %v695, %v711
    %v728 = vadd.f32 %v696, %v712
    %v729 = vadd.f32 %v697, %v713
    %v730 = vadd.f32 %v698, %v714
    %v731 = vadd.f32 %v699, %v715
    %v732 = vadd.f32 %v700, %v716
    %v733 = vadd.f32 %v701, %v717
    %v734 = vmul.f32 %v463, 0.16666667
    %v735 = vmul.f32 %v468, 0.16666667
    %v736 = vmul.f32 %v473, 0.16666667
    %v737 = vmul.f32 %v478, 0.16666667
    %v738 = vmul.f32 %v483, 0.16666667
    %v739 = vmul.f32 %v488, 0.16666667
    %v740 = vmul.f32 %v493, 0.16666667
    %v741 = vmul.f32 %v498, 0.16666667
    %v742 = vmul.f32 %v503, 0.16666667
    %v743 = vmul.f32 %v508, 0.16666667
    %v744 = vmul.f32 %v513, 0.16666667
    %v745 = vmul.f32 %v518, 0.16666667
    %v746 = vmul.f32 %v523, 0.16666667
    %v747 = vmul.f32 %v528, 0.16666667
    %v748 = vmul.f32 %v533, 0.16666667
    %v749 = vmul.f32 %v538, 0.16666667
    %v750 = vadd.f32 %v718, %v734
    %v751 = vadd.f32 %v719, %v735
    %v752 = vadd.f32 %v720, %v736
    %v753 = vadd.f32 %v721, %v737
    %v754 = vadd.f32 %v722, %v738
    %v755 = vadd.f32 %v723, %v739
    %v756 = vadd.f32 %v724, %v740
    %v757 = vadd.f32 %v725, %v741
    %v758 = vadd.f32 %v726, %v742
    %v759 = vadd.f32 %v727, %v743
    %v760 = vadd.f32 %v728, %v744
    %v761 = vadd.f32 %v729, %v745
    %v762 = vadd.f32 %v730, %v746
    %v763 = vadd.f32 %v731, %v747
    %v764 = vadd.f32 %v732, %v748
    %v765 = vadd.f32 %v733, %v749
    %v766 = vmul.f32 %v155, 0.041666668
    %v767 = vmul.f32 %v156, 0.041666668
    %v768 = vmul.f32 %v157, 0.041666668
    %v769 = vmul.f32 %v158, 0.041666668
    %v770 = vmul.f32 %v159, 0.041666668
    %v771 = vmul.f32 %v160, 0.041666668
    %v772 = vmul.f32 %v161, 0.041666668
    %v773 = vmul.f32 %v162, 0.041666668
    %v774 = vmul.f32 %v163, 0.041666668
    %v775 = vmul.f32 %v164, 0.041666668
    %v776 = vmul.f32 %v165, 0.041666668
    %v777 = vmul.f32 %v166, 0.041666668
    %v778 = vmul.f32 %v167, 0.041666668
    %v779 = vmul.f32 %v168, 0.041666668
    %v780 = vmul.f32 %v169, 0.041666668
    %v781 = vmul.f32 %v170, 0.041666668
    %v782 = vmul.f32 %v235, 0.008333334
    %v783 = vmul.f32 %v236, 0.008333334
    %v784 = vmul.f32 %v237, 0.008333334
    %v785 = vmul.f32 %v238, 0.008333334
    %v786 = vmul.f32 %v239, 0.008333334
    %v787 = vmul.f32 %v240, 0.008333334
    %v788 = vmul.f32 %v241, 0.008333334
    %v789 = vmul.f32 %v242, 0.008333334
    %v790 = vmul.f32 %v243, 0.008333334
    %v791 = vmul.f32 %v244, 0.008333334
    %v792 = vmul.f32 %v245, 0.008333334
    %v793 = vmul.f32 %v246, 0.008333334
    %v794 = vmul.f32 %v247, 0.008333334
    %v795 = vmul.f32 %v248, 0.008333334
    %v796 = vmul.f32 %v249, 0.008333334
    %v797 = vmul.f32 %v250, 0.008333334
    %v798 = vadd.f32 %v766, %v782
    %v799 = vadd.f32 %v767, %v783
    %v800 = vadd.f32 %v768, %v784
    %v801 = vadd.f32 %v769, %v785
    %v802 = vadd.f32 %v770, %v786
    %v803 = vadd.f32 %v771, %v787
    %v804 = vadd.f32 %v772, %v788
    %v805 = vadd.f32 %v773, %v789
    %v806 = vadd.f32 %v774, %v790
    %v807 = vadd.f32 %v775, %v791
    %v808 = vadd.f32 %v776, %v792
    %v809 = vadd.f32 %v777, %v793
    %v810 = vadd.f32 %v778, %v794
    %v811 = vadd.f32 %v779, %v795
    %v812 = vadd.f32 %v780, %v796
    %v813 = vadd.f32 %v781, %v797
    %v814 = vmul.f32 %v318, 0.0013888889
    %v815 = vmul.f32 %v323, 0.0013888889
    %v816 = vmul.f32 %v328, 0.0013888889
    %v817 = vmul.f32 %v333, 0.0013888889
    %v818 = vmul.f32 %v338, 0.0013888889
    %v819 = vmul.f32 %v343, 0.0013888889
    %v820 = vmul.f32 %v348, 0.0013888889
    %v821 = vmul.f32 %v353, 0.0013888889
    %v822 = vmul.f32 %v358, 0.0013888889
    %v823 = vmul.f32 %v363, 0.0013888889
    %v824 = vmul.f32 %v368, 0.0013888889
    %v825 = vmul.f32 %v373, 0.0013888889
    %v826 = vmul.f32 %v378, 0.0013888889
    %v827 = vmul.f32 %v383, 0.0013888889
    %v828 = vmul.f32 %v388, 0.0013888889
    %v829 = vmul.f32 %v393, 0.0013888889
    %v830 = vadd.f32 %v798, %v814
    %v831 = vadd.f32 %v799, %v815
    %v832 = vadd.f32 %v800, %v816
    %v833 = vadd.f32 %v801, %v817
    %v834 = vadd.f32 %v802, %v818
    %v835 = vadd.f32 %v803, %v819
    %v836 = vadd.f32 %v804, %v820
    %v837 = vadd.f32 %v805, %v821
    %v838 = vadd.f32 %v806, %v822
    %v839 = vadd.f32 %v807, %v823
    %v840 = vadd.f32 %v808, %v824
    %v841 = vadd.f32 %v809, %v825
    %v842 = vadd.f32 %v810, %v826
    %v843 = vadd.f32 %v811, %v827
    %v844 = vadd.f32 %v812, %v828
    %v845 = vadd.f32 %v813, %v829
    %v846 = vmul.f32 %v463, 0.0001984127
    %v847 = vmul.f32 %v468, 0.0001984127
    %v848 = vmul.f32 %v473, 0.0001984127
    %v849 = vmul.f32 %v478, 0.0001984127
    %v850 = vmul.f32 %v483, 0.0001984127
    %v851 = vmul.f32 %v488, 0.0001984127
    %v852 = vmul.f32 %v493, 0.0001984127
    %v853 = vmul.f32 %v498, 0.0001984127
    %v854 = vmul.f32 %v503, 0.0001984127
    %v855 = vmul.f32 %v508, 0.0001984127
    %v856 = vmul.f32 %v513, 0.0001984127
    %v857 = vmul.f32 %v518, 0.0001984127
    %v858 = vmul.f32 %v523, 0.0001984127
    %v859 = vmul.f32 %v528, 0.0001984127
    %v860 = vmul.f32 %v533, 0.0001984127
    %v861 = vmul.f32 %v538, 0.0001984127
    %v862 = vadd.f32 %v830, %v846
    %v863 = vadd.f32 %v831, %v847
    %v864 = vadd.f32 %v832, %v848
    %v865 = vadd.f32 %v833, %v849
    %v866 = vadd.f32 %v834, %v850
    %v867 = vadd.f32 %v835, %v851
    %v868 = vadd.f32 %v836, %v852
    %v869 = vadd.f32 %v837, %v853
    %v870 = vadd.f32 %v838, %v854
    %v871 = vadd.f32 %v839, %v855
    %v872 = vadd.f32 %v840, %v856
    %v873 = vadd.f32 %v841, %v857
    %v874 = vadd.f32 %v842, %v858
    %v875 = vadd.f32 %v843, %v859
    %v876 = vadd.f32 %v844, %v860
    %v877 = vadd.f32 %v845, %v861
    %878 = vmatprep.subr.mxu0 0.0
    %879 = vmatpush1.msra.mxu0 %v877
    %880 = vmatprep.subr.mxu0 0.0
    %881 = vmatpush1.msra.mxu0 %v876
    %882 = vmatprep.subr.mxu0 0.0
    %883 = vmatpush1.msra.mxu0 %v875
    %884 = vmatprep.subr.mxu0 0.0
    %885 = vmatpush1.msra.mxu0 %v874
    %886 = vmatprep.subr.mxu0 0.0
    %887 = vmatpush1.msra.mxu0 %v873
    %888 = vmatprep.subr.mxu0 0.0
    %889 = vmatpush1.msra.mxu0 %v872
    %890 = vmatprep.subr.mxu0 0.0
    %891 = vmatpush1.msra.mxu0 %v871
    %892 = vmatprep.subr.mxu0 0.0
    %893 = vmatpush1.msra.mxu0 %v870
    %894 = vmatprep.subr.mxu0 0.0
    %895 = vmatpush1.msra.mxu0 %v869
    %896 = vmatprep.subr.mxu0 0.0
    %897 = vmatpush1.msra.mxu0 %v868
    %898 = vmatprep.subr.mxu0 0.0
    %899 = vmatpush1.msra.mxu0 %v867
    %900 = vmatprep.subr.mxu0 0.0
    %901 = vmatpush1.msra.mxu0 %v866
    %902 = vmatprep.subr.mxu0 0.0
    %903 = vmatpush1.msra.mxu0 %v865
    %904 = vmatprep.subr.mxu0 0.0
    %905 = vmatpush1.msra.mxu0 %v864
    %906 = vmatprep.subr.mxu0 0.0
    %907 = vmatpush1.msra.mxu0 %v863
    %908 = vmatprep.subr.mxu0 0.0
    %909 = vmatpush1.msra.mxu0 %v862
    %910 = vmatprep.subr.mxu0 0.0
    %911 = vmatpush2.msra.mxu0 0.0
    %912 = vmatprep.subr.mxu0 0.0
    %913 = vmatpush2.msra.mxu0 0.0
    %914 = vmatprep.subr.mxu0 0.0
    %915 = vmatpush2.msra.mxu0 0.0
    %916 = vmatprep.subr.mxu0 0.0
    %917 = vmatpush2.msra.mxu0 0.0
    %918 = vmatprep.subr.mxu0 0.0
    %919 = vmatpush2.msra.mxu0 0.0
    %920 = vmatprep.subr.mxu0 0.0
    %921 = vmatpush2.msra.mxu0 0.0
    %922 = vmatprep.subr.mxu0 0.0
    %923 = vmatpush2.msra.mxu0 0.0
    %924 = vmatprep.subr.mxu0 0.0
    %925 = vmatpush2.msra.mxu0 0.0
    %926 = vmatprep.subr.mxu0 0.0
    %927 = vmatpush2.msra.mxu0 0.0
    %928 = vmatprep.subr.mxu0 0.0
    %929 = vmatpush2.msra.mxu0 0.0
    %930 = vmatprep.subr.mxu0 0.0
    %931 = vmatpush2.msra.mxu0 0.0
    %932 = vmatprep.subr.mxu0 0.0
    %933 = vmatpush2.msra.mxu0 0.0
    %934 = vmatprep.subr.mxu0 0.0
    %935 = vmatpush2.msra.mxu0 0.0
    %936 = vmatprep.subr.mxu0 0.0
    %937 = vmatpush2.msra.mxu0 0.0
    %938 = vmatprep.subr.mxu0 0.0
    %939 = vmatpush2.msra.mxu0 0.0
    %940 = vmatprep.subr.mxu0 0.0
    %941 = vmatpush2.msra.mxu0 0.0
    %942 = vmatprep.mubr.f32.mxu0 0.0
    %943 = vmatmul.mubr.f32.gmra.mxu0 %v608
    %v944 = vpop.f32.mrf.mxu0
    %v945 = vadd.f32 0.0, %v944
    %v946 = vpop.f32.mrf.mxu0
    %947 = vmatprep.mubr.f32.mxu0 0.0
    %948 = vmatmul.mubr.f32.gmra.mxu0 %v613
    %v949 = vpop.f32.mrf.mxu0
    %v950 = vadd.f32 0.0, %v949
    %v951 = vpop.f32.mrf.mxu0
    %952 = vmatprep.mubr.f32.mxu0 0.0
    %953 = vmatmul.mubr.f32.gmra.mxu0 %v618
    %v954 = vpop.f32.mrf.mxu0
    %v955 = vadd.f32 0.0, %v954
    %v956 = vpop.f32.mrf.mxu0
    %957 = vmatprep.mubr.f32.mxu0 0.0
    %958 = vmatmul.mubr.f32.gmra.mxu0 %v623
    %v959 = vpop.f32.mrf.mxu0
    %v960 = vadd.f32 0.0, %v959
    %v961 = vpop.f32.mrf.mxu0
    %962 = vmatprep.mubr.f32.mxu0 0.0
    %963 = vmatmul.mubr.f32.gmra.mxu0 %v628
    %v964 = vpop.f32.mrf.mxu0
    %v965 = vadd.f32 0.0, %v964
    %v966 = vpop.f32.mrf.mxu0
    %967 = vmatprep.mubr.f32.mxu0 0.0
    %968 = vmatmul.mubr.f32.gmra.mxu0 %v633
    %v969 = vpop.f32.mrf.mxu0
    %v970 = vadd.f32 0.0, %v969
    %v971 = vpop.f32.mrf.mxu0
    %972 = vmatprep.mubr.f32.mxu0 0.0
    %973 = vmatmul.mubr.f32.gmra.mxu0 %v638
    %v974 = vpop.f32.mrf.mxu0
    %v975 = vadd.f32 0.0, %v974
    %v976 = vpop.f32.mrf.mxu0
    %977 = vmatprep.mubr.f32.mxu0 0.0
    %978 = vmatmul.mubr.f32.gmra.mxu0 %v643
    %v979 = vpop.f32.mrf.mxu0
    %v980 = vadd.f32 0.0, %v979
    %v981 = vpop.f32.mrf.mxu0
    %982 = vmatprep.mubr.f32.mxu0 0.0
    %983 = vmatmul.mubr.f32.gmra.mxu0 %v648
    %v984 = vpop.f32.mrf.mxu0
    %v985 = vadd.f32 0.0, %v984
    %v986 = vpop.f32.mrf.mxu0
    %987 = vmatprep.mubr.f32.mxu0 0.0
    %988 = vmatmul.mubr.f32.gmra.mxu0 %v653
    %v989 = vpop.f32.mrf.mxu0
    %v990 = vadd.f32 0.0, %v989
    %v991 = vpop.f32.mrf.mxu0
    %992 = vmatprep.mubr.f32.mxu0 0.0
    %993 = vmatmul.mubr.f32.gmra.mxu0 %v658
    %v994 = vpop.f32.mrf.mxu0
    %v995 = vadd.f32 0.0, %v994
    %v996 = vpop.f32.mrf.mxu0
    %997 = vmatprep.mubr.f32.mxu0 0.0
    %998 = vmatmul.mubr.f32.gmra.mxu0 %v663
    %v999 = vpop.f32.mrf.mxu0
    %v1000 = vadd.f32 0.0, %v999
    %v1001 = vpop.f32.mrf.mxu0
    %1002 = vmatprep.mubr.f32.mxu0 0.0
    %1003 = vmatmul.mubr.f32.gmra.mxu0 %v668
    %v1004 = vpop.f32.mrf.mxu0
    %v1005 = vadd.f32 0.0, %v1004
    %v1006 = vpop.f32.mrf.mxu0
    %1007 = vmatprep.mubr.f32.mxu0 0.0
    %1008 = vmatmul.mubr.f32.gmra.mxu0 %v673
    %v1009 = vpop.f32.mrf.mxu0
    %v1010 = vadd.f32 0.0, %v1009
    %v1011 = vpop.f32.mrf.mxu0
    %1012 = vmatprep.mubr.f32.mxu0 0.0
    %1013 = vmatmul.mubr.f32.gmra.mxu0 %v678
    %v1014 = vpop.f32.mrf.mxu0
    %v1015 = vadd.f32 0.0, %v1014
    %v1016 = vpop.f32.mrf.mxu0
    %1017 = vmatprep.mubr.f32.mxu0 0.0
    %1018 = vmatmul.mubr.f32.gmra.mxu0 %v683
    %v1019 = vpop.f32.mrf.mxu0
    %v1020 = vadd.f32 0.0, %v1019
    %v1021 = vpop.f32.mrf.mxu0
    %1022 = vdwg.mxu0
    %v1023 = vadd.f32 %v750, %v945
    %v1024 = vadd.f32 %v751, %v950
    %v1025 = vadd.f32 %v752, %v955
    %v1026 = vadd.f32 %v753, %v960
    %v1027 = vadd.f32 %v754, %v965
    %v1028 = vadd.f32 %v755, %v970
    %v1029 = vadd.f32 %v756, %v975
    %v1030 = vadd.f32 %v757, %v980
    %v1031 = vadd.f32 %v758, %v985
    %v1032 = vadd.f32 %v759, %v990
    %v1033 = vadd.f32 %v760, %v995
    %v1034 = vadd.f32 %v761, %v1000
    %v1035 = vadd.f32 %v762, %v1005
    %v1036 = vadd.f32 %v763, %v1010
    %v1037 = vadd.f32 %v764, %v1015
    %v1038 = vadd.f32 %v765, %v1020
    %1039 = vmatprep.subr.mxu0 0.0
    %1040 = vmatpush1.msra.mxu0 %v1038
    %1041 = vmatprep.subr.mxu0 0.0
    %1042 = vmatpush1.msra.mxu0 %v1037
    %1043 = vmatprep.subr.mxu0 0.0
    %1044 = vmatpush1.msra.mxu0 %v1036
    %1045 = vmatprep.subr.mxu0 0.0
    %1046 = vmatpush1.msra.mxu0 %v1035
    %1047 = vmatprep.subr.mxu0 0.0
    %1048 = vmatpush1.msra.mxu0 %v1034
    %1049 = vmatprep.subr.mxu0 0.0
    %1050 = vmatpush1.msra.mxu0 %v1033
    %1051 = vmatprep.subr.mxu0 0.0
    %1052 = vmatpush1.msra.mxu0 %v1032
    %1053 = vmatprep.subr.mxu0 0.0
    %1054 = vmatpush1.msra.mxu0 %v1031
    %1055 = vmatprep.subr.mxu0 0.0
    %1056 = vmatpush1.msra.mxu0 %v1030
    %1057 = vmatprep.subr.mxu0 0.0
    %1058 = vmatpush1.msra.mxu0 %v1029
    %1059 = vmatprep.subr.mxu0 0.0
    %1060 = vmatpush1.msra.mxu0 %v1028
    %1061 = vmatprep.subr.mxu0 0.0
    %1062 = vmatpush1.msra.mxu0 %v1027
    %1063 = vmatprep.subr.mxu0 0.0
    %1064 = vmatpush1.msra.mxu0 %v1026
    %1065 = vmatprep.subr.mxu0 0.0
    %1066 = vmatpush1.msra.mxu0 %v1025
    %1067 = vmatprep.subr.mxu0 0.0
    %1068 = vmatpush1.msra.mxu0 %v1024
    %1069 = vmatprep.subr.mxu0 0.0
    %1070 = vmatpush1.msra.mxu0 %v1023
    %1071 = vmatprep.subr.mxu0 0.0
    %1072 = vmatpush2.msra.mxu0 0.0
    %1073 = vmatprep.subr.mxu0 0.0
    %1074 = vmatpush2.msra.mxu0 0.0
    %1075 = vmatprep.subr.mxu0 0.0
    %1076 = vmatpush2.msra.mxu0 0.0
    %1077 = vmatprep.subr.mxu0 0.0
    %1078 = vmatpush2.msra.mxu0 0.0
    %1079 = vmatprep.subr.mxu0 0.0
    %1080 = vmatpush2.msra.mxu0 0.0
    %1081 = vmatprep.subr.mxu0 0.0
    %1082 = vmatpush2.msra.mxu0 0.0
    %1083 = vmatprep.subr.mxu0 0.0
    %1084 = vmatpush2.msra.mxu0 0.0
    %1085 = vmatprep.subr.mxu0 0.0
    %1086 = vmatpush2.msra.mxu0 0.0
    %1087 = vmatprep.subr.mxu0 0.0
    %1088 = vmatpush2.msra.mxu0 0.0
    %1089 = vmatprep.subr.mxu0 0.0
    %1090 = vmatpush2.msra.mxu0 0.0
    %1091 = vmatprep.subr.mxu0 0.0
    %1092 = vmatpush2.msra.mxu0 0.0
    %1093 = vmatprep.subr.mxu0 0.0
    %1094 = vmatpush2.msra.mxu0 0.0
    %1095 = vmatprep.subr.mxu0 0.0
    %1096 = vmatpush2.msra.mxu0 0.0
    %1097 = vmatprep.subr.mxu0 0.0
    %1098 = vmatpush2.msra.mxu0 0.0
    %1099 = vmatprep.subr.mxu0 0.0
    %1100 = vmatpush2.msra.mxu0 0.0
    %1101 = vmatprep.subr.mxu0 0.0
    %1102 = vmatpush2.msra.mxu0 0.0
    %1103 = vmatprep.mubr.f32.mxu0 0.0
    %1104 = vmatmul.mubr.f32.gmra.mxu0 %v1023
    %v1105 = vpop.f32.mrf.mxu0
    %v1106 = vadd.f32 0.0, %v1105
    %v1107 = vpop.f32.mrf.mxu0
    %1108 = vmatprep.mubr.f32.mxu0 0.0
    %1109 = vmatmul.mubr.f32.gmra.mxu0 %v1024
    %v1110 = vpop.f32.mrf.mxu0
    %v1111 = vadd.f32 0.0, %v1110
    %v1112 = vpop.f32.mrf.mxu0
    %1113 = vmatprep.mubr.f32.mxu0 0.0
    %1114 = vmatmul.mubr.f32.gmra.mxu0 %v1025
    %v1115 = vpop.f32.mrf.mxu0
    %v1116 = vadd.f32 0.0, %v1115
    %v1117 = vpop.f32.mrf.mxu0
    %1118 = vmatprep.mubr.f32.mxu0 0.0
    %1119 = vmatmul.mubr.f32.gmra.mxu0 %v1026
    %v1120 = vpop.f32.mrf.mxu0
    %v1121 = vadd.f32 0.0, %v1120
    %v1122 = vpop.f32.mrf.mxu0
    %1123 = vmatprep.mubr.f32.mxu0 0.0
    %1124 = vmatmul.mubr.f32.gmra.mxu0 %v1027
    %v1125 = vpop.f32.mrf.mxu0
    %v1126 = vadd.f32 0.0, %v1125
    %v1127 = vpop.f32.mrf.mxu0
    %1128 = vmatprep.mubr.f32.mxu0 0.0
    %1129 = vmatmul.mubr.f32.gmra.mxu0 %v1028
    %v1130 = vpop.f32.mrf.mxu0
    %v1131 = vadd.f32 0.0, %v1130
    %v1132 = vpop.f32.mrf.mxu0
    %1133 = vmatprep.mubr.f32.mxu0 0.0
    %1134 = vmatmul.mubr.f32.gmra.mxu0 %v1029
    %v1135 = vpop.f32.mrf.mxu0
    %v1136 = vadd.f32 0.0, %v1135
    %v1137 = vpop.f32.mrf.mxu0
    %1138 = vmatprep.mubr.f32.mxu0 0.0
    %1139 = vmatmul.mubr.f32.gmra.mxu0 %v1030
    %v1140 = vpop.f32.mrf.mxu0
    %v1141 = vadd.f32 0.0, %v1140
    %v1142 = vpop.f32.mrf.mxu0
    %1143 = vmatprep.mubr.f32.mxu0 0.0
    %1144 = vmatmul.mubr.f32.gmra.mxu0 %v1031
    %v1145 = vpop.f32.mrf.mxu0
    %v1146 = vadd.f32 0.0, %v1145
    %v1147 = vpop.f32.mrf.mxu0
    %1148 = vmatprep.mubr.f32.mxu0 0.0
    %1149 = vmatmul.mubr.f32.gmra.mxu0 %v1032
    %v1150 = vpop.f32.mrf.mxu0
    %v1151 = vadd.f32 0.0, %v1150
    %v1152 = vpop.f32.mrf.mxu0
    %1153 = vmatprep.mubr.f32.mxu0 0.0
    %1154 = vmatmul.mubr.f32.gmra.mxu0 %v1033
    %v1155 = vpop.f32.mrf.mxu0
    %v1156 = vadd.f32 0.0, %v1155
    %v1157 = vpop.f32.mrf.mxu0
    %1158 = vmatprep.mubr.f32.mxu0 0.0
    %1159 = vmatmul.mubr.f32.gmra.mxu0 %v1034
    %v1160 = vpop.f32.mrf.mxu0
    %v1161 = vadd.f32 0.0, %v1160
    %v1162 = vpop.f32.mrf.mxu0
    %1163 = vmatprep.mubr.f32.mxu0 0.0
    %1164 = vmatmul.mubr.f32.gmra.mxu0 %v1035
    %v1165 = vpop.f32.mrf.mxu0
    %v1166 = vadd.f32 0.0, %v1165
    %v1167 = vpop.f32.mrf.mxu0
    %1168 = vmatprep.mubr.f32.mxu0 0.0
    %1169 = vmatmul.mubr.f32.gmra.mxu0 %v1036
    %v1170 = vpop.f32.mrf.mxu0
    %v1171 = vadd.f32 0.0, %v1170
    %v1172 = vpop.f32.mrf.mxu0
    %1173 = vmatprep.mubr.f32.mxu0 0.0
    %1174 = vmatmul.mubr.f32.gmra.mxu0 %v1037
    %v1175 = vpop.f32.mrf.mxu0
    %v1176 = vadd.f32 0.0, %v1175
    %v1177 = vpop.f32.mrf.mxu0
    %1178 = vmatprep.mubr.f32.mxu0 0.0
    %1179 = vmatmul.mubr.f32.gmra.mxu0 %v1038
    %v1180 = vpop.f32.mrf.mxu0
    %v1181 = vadd.f32 0.0, %v1180
    %v1182 = vpop.f32.mrf.mxu0
    %1183 = vdwg.mxu0
    %1184 = vmatprep.subr.mxu0 0.0
    %1185 = vmatpush1.msra.mxu0 %v1181
    %1186 = vmatprep.subr.mxu0 0.0
    %1187 = vmatpush1.msra.mxu0 %v1176
    %1188 = vmatprep.subr.mxu0 0.0
    %1189 = vmatpush1.msra.mxu0 %v1171
    %1190 = vmatprep.subr.mxu0 0.0
    %1191 = vmatpush1.msra.mxu0 %v1166
    %1192 = vmatprep.subr.mxu0 0.0
    %1193 = vmatpush1.msra.mxu0 %v1161
    %1194 = vmatprep.subr.mxu0 0.0
    %1195 = vmatpush1.msra.mxu0 %v1156
    %1196 = vmatprep.subr.mxu0 0.0
    %1197 = vmatpush1.msra.mxu0 %v1151
    %1198 = vmatprep.subr.mxu0 0.0
    %1199 = vmatpush1.msra.mxu0 %v1146
    %1200 = vmatprep.subr.mxu0 0.0
    %1201 = vmatpush1.msra.mxu0 %v1141
    %1202 = vmatprep.subr.mxu0 0.0
    %1203 = vmatpush1.msra.mxu0 %v1136
    %1204 = vmatprep.subr.mxu0 0.0
    %1205 = vmatpush1.msra.mxu0 %v1131
    %1206 = vmatprep.subr.mxu0 0.0
    %1207 = vmatpush1.msra.mxu0 %v1126
    %1208 = vmatprep.subr.mxu0 0.0
    %1209 = vmatpush1.msra.mxu0 %v1121
    %1210 = vmatprep.subr.mxu0 0.0
    %1211 = vmatpush1.msra.mxu0 %v1116
    %1212 = vmatprep.subr.mxu0 0.0
    %1213 = vmatpush1.msra.mxu0 %v1111
    %1214 = vmatprep.subr.mxu0 0.0
    %1215 = vmatpush1.msra.mxu0 %v1106
    %1216 = vmatprep.subr.mxu0 0.0
    %1217 = vmatpush2.msra.mxu0 0.0
    %1218 = vmatprep.subr.mxu0 0.0
    %1219 = vmatpush2.msra.mxu0 0.0
    %1220 = vmatprep.subr.mxu0 0.0
    %1221 = vmatpush2.msra.mxu0 0.0
    %1222 = vmatprep.subr.mxu0 0.0
    %1223 = vmatpush2.msra.mxu0 0.0
    %1224 = vmatprep.subr.mxu0 0.0
    %1225 = vmatpush2.msra.mxu0 0.0
    %1226 = vmatprep.subr.mxu0 0.0
    %1227 = vmatpush2.msra.mxu0 0.0
    %1228 = vmatprep.subr.mxu0 0.0
    %1229 = vmatpush2.msra.mxu0 0.0
    %1230 = vmatprep.subr.mxu0 0.0
    %1231 = vmatpush2.msra.mxu0 0.0
    %1232 = vmatprep.subr.mxu0 0.0
    %1233 = vmatpush2.msra.mxu0 0.0
    %1234 = vmatprep.subr.mxu0 0.0
    %1235 = vmatpush2.msra.mxu0 0.0
    %1236 = vmatprep.subr.mxu0 0.0
    %1237 = vmatpush2.msra.mxu0 0.0
    %1238 = vmatprep.subr.mxu0 0.0
    %1239 = vmatpush2.msra.mxu0 0.0
    %1240 = vmatprep.subr.mxu0 0.0
    %1241 = vmatpush2.msra.mxu0 0.0
    %1242 = vmatprep.subr.mxu0 0.0
    %1243 = vmatpush2.msra.mxu0 0.0
    %1244 = vmatprep.subr.mxu0 0.0
    %1245 = vmatpush2.msra.mxu0 0.0
    %1246 = vmatprep.subr.mxu0 0.0
    %1247 = vmatpush2.msra.mxu0 0.0
    %1248 = vmatprep.mubr.f32.mxu0 0.0
    %1249 = vmatmul.mubr.f32.gmra.mxu0 %v1106
    %v1250 = vpop.f32.mrf.mxu0
    %v1251 = vadd.f32 0.0, %v1250
    %v1252 = vpop.f32.mrf.mxu0
    %1253 = vmatprep.mubr.f32.mxu0 0.0
    %1254 = vmatmul.mubr.f32.gmra.mxu0 %v1111
    %v1255 = vpop.f32.mrf.mxu0
    %v1256 = vadd.f32 0.0, %v1255
    %v1257 = vpop.f32.mrf.mxu0
    %1258 = vmatprep.mubr.f32.mxu0 0.0
    %1259 = vmatmul.mubr.f32.gmra.mxu0 %v1116
    %v1260 = vpop.f32.mrf.mxu0
    %v1261 = vadd.f32 0.0, %v1260
    %v1262 = vpop.f32.mrf.mxu0
    %1263 = vmatprep.mubr.f32.mxu0 0.0
    %1264 = vmatmul.mubr.f32.gmra.mxu0 %v1121
    %v1265 = vpop.f32.mrf.mxu0
    %v1266 = vadd.f32 0.0, %v1265
    %v1267 = vpop.f32.mrf.mxu0
    %1268 = vmatprep.mubr.f32.mxu0 0.0
    %1269 = vmatmul.mubr.f32.gmra.mxu0 %v1126
    %v1270 = vpop.f32.mrf.mxu0
    %v1271 = vadd.f32 0.0, %v1270
    %v1272 = vpop.f32.mrf.mxu0
    %1273 = vmatprep.mubr.f32.mxu0 0.0
    %1274 = vmatmul.mubr.f32.gmra.mxu0 %v1131
    %v1275 = vpop.f32.mrf.mxu0
    %v1276 = vadd.f32 0.0, %v1275
    %v1277 = vpop.f32.mrf.mxu0
    %1278 = vmatprep.mubr.f32.mxu0 0.0
    %1279 = vmatmul.mubr.f32.gmra.mxu0 %v1136
    %v1280 = vpop.f32.mrf.mxu0
    %v1281 = vadd.f32 0.0, %v1280
    %v1282 = vpop.f32.mrf.mxu0
    %1283 = vmatprep.mubr.f32.mxu0 0.0
    %1284 = vmatmul.mubr.f32.gmra.mxu0 %v1141
    %v1285 = vpop.f32.mrf.mxu0
    %v1286 = vadd.f32 0.0, %v1285
    %v1287 = vpop.f32.mrf.mxu0
    %1288 = vmatprep.mubr.f32.mxu0 0.0
    %1289 = vmatmul.mubr.f32.gmra.mxu0 %v1146
    %v1290 = vpop.f32.mrf.mxu0
    %v1291 = vadd.f32 0.0, %v1290
    %v1292 = vpop.f32.mrf.mxu0
    %1293 = vmatprep.mubr.f32.mxu0 0.0
    %1294 = vmatmul.mubr.f32.gmra.mxu0 %v1151
    %v1295 = vpop.f32.mrf.mxu0
    %v1296 = vadd.f32 0.0, %v1295
    %v1297 = vpop.f32.mrf.mxu0
    %1298 = vmatprep.mubr.f32.mxu0 0.0
    %1299 = vmatmul.mubr.f32.gmra.mxu0 %v1156
    %v1300 = vpop.f32.mrf.mxu0
    %v1301 = vadd.f32 0.0, %v1300
    %v1302 = vpop.f32.mrf.mxu0
    %1303 = vmatprep.mubr.f32.mxu0 0.0
    %1304 = vmatmul.mubr.f32.gmra.mxu0 %v1161
    %v1305 = vpop.f32.mrf.mxu0
    %v1306 = vadd.f32 0.0, %v1305
    %v1307 = vpop.f32.mrf.mxu0
    %1308 = vmatprep.mubr.f32.mxu0 0.0
    %1309 = vmatmul.mubr.f32.gmra.mxu0 %v1166
    %v1310 = vpop.f32.mrf.mxu0
    %v1311 = vadd.f32 0.0, %v1310
    %v1312 = vpop.f32.mrf.mxu0
    %1313 = vmatprep.mubr.f32.mxu0 0.0
    %1314 = vmatmul.mubr.f32.gmra.mxu0 %v1171
    %v1315 = vpop.f32.mrf.mxu0
    %v1316 = vadd.f32 0.0, %v1315
    %v1317 = vpop.f32.mrf.mxu0
    %1318 = vmatprep.mubr.f32.mxu0 0.0
    %1319 = vmatmul.mubr.f32.gmra.mxu0 %v1176
    %v1320 = vpop.f32.mrf.mxu0
    %v1321 = vadd.f32 0.0, %v1320
    %v1322 = vpop.f32.mrf.mxu0
    %1323 = vmatprep.mubr.f32.mxu0 0.0
    %1324 = vmatmul.mubr.f32.gmra.mxu0 %v1181
    %v1325 = vpop.f32.mrf.mxu0
    %v1326 = vadd.f32 0.0, %v1325
    %v1327 = vpop.f32.mrf.mxu0
    %1328 = vdwg.mxu0
    %1329 = vmatprep.subr.mxu0 0.0
    %1330 = vmatpush1.msra.mxu0 %v1326
    %1331 = vmatprep.subr.mxu0 0.0
    %1332 = vmatpush1.msra.mxu0 %v1321
    %1333 = vmatprep.subr.mxu0 0.0
    %1334 = vmatpush1.msra.mxu0 %v1316
    %1335 = vmatprep.subr.mxu0 0.0
    %1336 = vmatpush1.msra.mxu0 %v1311
    %1337 = vmatprep.subr.mxu0 0.0
    %1338 = vmatpush1.msra.mxu0 %v1306
    %1339 = vmatprep.subr.mxu0 0.0
    %1340 = vmatpush1.msra.mxu0 %v1301
    %1341 = vmatprep.subr.mxu0 0.0
    %1342 = vmatpush1.msra.mxu0 %v1296
    %1343 = vmatprep.subr.mxu0 0.0
    %1344 = vmatpush1.msra.mxu0 %v1291
    %1345 = vmatprep.subr.mxu0 0.0
    %1346 = vmatpush1.msra.mxu0 %v1286
    %1347 = vmatprep.subr.mxu0 0.0
    %1348 = vmatpush1.msra.mxu0 %v1281
    %1349 = vmatprep.subr.mxu0 0.0
    %1350 = vmatpush1.msra.mxu0 %v1276
    %1351 = vmatprep.subr.mxu0 0.0
    %1352 = vmatpush1.msra.mxu0 %v1271
    %1353 = vmatprep.subr.mxu0 0.0
    %1354 = vmatpush1.msra.mxu0 %v1266
    %1355 = vmatprep.subr.mxu0 0.0
    %1356 = vmatpush1.msra.mxu0 %v1261
    %1357 = vmatprep.subr.mxu0 0.0
    %1358 = vmatpush1.msra.mxu0 %v1256
    %1359 = vmatprep.subr.mxu0 0.0
    %1360 = vmatpush1.msra.mxu0 %v1251
    %1361 = vmatprep.subr.mxu0 0.0
    %1362 = vmatpush2.msra.mxu0 0.0
    %1363 = vmatprep.subr.mxu0 0.0
    %1364 = vmatpush2.msra.mxu0 0.0
    %1365 = vmatprep.subr.mxu0 0.0
    %1366 = vmatpush2.msra.mxu0 0.0
    %1367 = vmatprep.subr.mxu0 0.0
    %1368 = vmatpush2.msra.mxu0 0.0
    %1369 = vmatprep.subr.mxu0 0.0
    %1370 = vmatpush2.msra.mxu0 0.0
    %1371 = vmatprep.subr.mxu0 0.0
    %1372 = vmatpush2.msra.mxu0 0.0
    %1373 = vmatprep.subr.mxu0 0.0
    %1374 = vmatpush2.msra.mxu0 0.0
    %1375 = vmatprep.subr.mxu0 0.0
    %1376 = vmatpush2.msra.mxu0 0.0
    %1377 = vmatprep.subr.mxu0 0.0
    %1378 = vmatpush2.msra.mxu0 0.0
    %1379 = vmatprep.subr.mxu0 0.0
    %1380 = vmatpush2.msra.mxu0 0.0
    %1381 = vmatprep.subr.mxu0 0.0
    %1382 = vmatpush2.msra.mxu0 0.0
    %1383 = vmatprep.subr.mxu0 0.0
    %1384 = vmatpush2.msra.mxu0 0.0
    %1385 = vmatprep.subr.mxu0 0.0
    %1386 = vmatpush2.msra.mxu0 0.0
    %1387 = vmatprep.subr.mxu0 0.0
    %1388 = vmatpush2.msra.mxu0 0.0
    %1389 = vmatprep.subr.mxu0 0.0
    %1390 = vmatpush2.msra.mxu0 0.0
    %1391 = vmatprep.subr.mxu0 0.0
    %1392 = vmatpush2.msra.mxu0 0.0
    %1393 = vmatprep.mubr.f32.mxu0 0.0
    %1394 = vmatmul.mubr.f32.gmra.mxu0 %v1251
    %v1395 = vpop.f32.mrf.mxu0
    %v1396 = vadd.f32 0.0, %v1395
    %v1397 = vpop.f32.mrf.mxu0
    %1398 = vmatprep.mubr.f32.mxu0 0.0
    %1399 = vmatmul.mubr.f32.gmra.mxu0 %v1256
    %v1400 = vpop.f32.mrf.mxu0
    %v1401 = vadd.f32 0.0, %v1400
    %v1402 = vpop.f32.mrf.mxu0
    %1403 = vmatprep.mubr.f32.mxu0 0.0
    %1404 = vmatmul.mubr.f32.gmra.mxu0 %v1261
    %v1405 = vpop.f32.mrf.mxu0
    %v1406 = vadd.f32 0.0, %v1405
    %v1407 = vpop.f32.mrf.mxu0
    %1408 = vmatprep.mubr.f32.mxu0 0.0
    %1409 = vmatmul.mubr.f32.gmra.mxu0 %v1266
    %v1410 = vpop.f32.mrf.mxu0
    %v1411 = vadd.f32 0.0, %v1410
    %v1412 = vpop.f32.mrf.mxu0
    %1413 = vmatprep.mubr.f32.mxu0 0.0
    %1414 = vmatmul.mubr.f32.gmra.mxu0 %v1271
    %v1415 = vpop.f32.mrf.mxu0
    %v1416 = vadd.f32 0.0, %v1415
    %v1417 = vpop.f32.mrf.mxu0
    %1418 = vmatprep.mubr.f32.mxu0 0.0
    %1419 = vmatmul.mubr.f32.gmra.mxu0 %v1276
    %v1420 = vpop.f32.mrf.mxu0
    %v1421 = vadd.f32 0.0, %v1420
    %v1422 = vpop.f32.mrf.mxu0
    %1423 = vmatprep.mubr.f32.mxu0 0.0
    %1424 = vmatmul.mubr.f32.gmra.mxu0 %v1281
    %v1425 = vpop.f32.mrf.mxu0
    %v1426 = vadd.f32 0.0, %v1425
    %v1427 = vpop.f32.mrf.mxu0
    %1428 = vmatprep.mubr.f32.mxu0 0.0
    %1429 = vmatmul.mubr.f32.gmra.mxu0 %v1286
    %v1430 = vpop.f32.mrf.mxu0
    %v1431 = vadd.f32 0.0, %v1430
    %v1432 = vpop.f32.mrf.mxu0
    %1433 = vmatprep.mubr.f32.mxu0 0.0
    %1434 = vmatmul.mubr.f32.gmra.mxu0 %v1291
    %v1435 = vpop.f32.mrf.mxu0
    %v1436 = vadd.f32 0.0, %v1435
    %v1437 = vpop.f32.mrf.mxu0
    %1438 = vmatprep.mubr.f32.mxu0 0.0
    %1439 = vmatmul.mubr.f32.gmra.mxu0 %v1296
    %v1440 = vpop.f32.mrf.mxu0
    %v1441 = vadd.f32 0.0, %v1440
    %v1442 = vpop.f32.mrf.mxu0
    %1443 = vmatprep.mubr.f32.mxu0 0.0
    %1444 = vmatmul.mubr.f32.gmra.mxu0 %v1301
    %v1445 = vpop.f32.mrf.mxu0
    %v1446 = vadd.f32 0.0, %v1445
    %v1447 = vpop.f32.mrf.mxu0
    %1448 = vmatprep.mubr.f32.mxu0 0.0
    %1449 = vmatmul.mubr.f32.gmra.mxu0 %v1306
    %v1450 = vpop.f32.mrf.mxu0
    %v1451 = vadd.f32 0.0, %v1450
    %v1452 = vpop.f32.mrf.mxu0
    %1453 = vmatprep.mubr.f32.mxu0 0.0
    %1454 = vmatmul.mubr.f32.gmra.mxu0 %v1311
    %v1455 = vpop.f32.mrf.mxu0
    %v1456 = vadd.f32 0.0, %v1455
    %v1457 = vpop.f32.mrf.mxu0
    %1458 = vmatprep.mubr.f32.mxu0 0.0
    %1459 = vmatmul.mubr.f32.gmra.mxu0 %v1316
    %v1460 = vpop.f32.mrf.mxu0
    %v1461 = vadd.f32 0.0, %v1460
    %v1462 = vpop.f32.mrf.mxu0
    %1463 = vmatprep.mubr.f32.mxu0 0.0
    %1464 = vmatmul.mubr.f32.gmra.mxu0 %v1321
    %v1465 = vpop.f32.mrf.mxu0
    %v1466 = vadd.f32 0.0, %v1465
    %v1467 = vpop.f32.mrf.mxu0
    %1468 = vmatprep.mubr.f32.mxu0 0.0
    %1469 = vmatmul.mubr.f32.gmra.mxu0 %v1326
    %v1470 = vpop.f32.mrf.mxu0
    %v1471 = vadd.f32 0.0, %v1470
    %v1472 = vpop.f32.mrf.mxu0
    %1473 = vdwg.mxu0
    %1474 = vmatprep.subr.mxu0 0.0
    %1475 = vmatpush1.msra.mxu0 %v1471
    %1476 = vmatprep.subr.mxu0 0.0
    %1477 = vmatpush1.msra.mxu0 %v1466
    %1478 = vmatprep.subr.mxu0 0.0
    %1479 = vmatpush1.msra.mxu0 %v1461
    %1480 = vmatprep.subr.mxu0 0.0
    %1481 = vmatpush1.msra.mxu0 %v1456
    %1482 = vmatprep.subr.mxu0 0.0
    %1483 = vmatpush1.msra.mxu0 %v1451
    %1484 = vmatprep.subr.mxu0 0.0
    %1485 = vmatpush1.msra.mxu0 %v1446
    %1486 = vmatprep.subr.mxu0 0.0
    %1487 = vmatpush1.msra.mxu0 %v1441
    %1488 = vmatprep.subr.mxu0 0.0
    %1489 = vmatpush1.msra.mxu0 %v1436
    %1490 = vmatprep.subr.mxu0 0.0
    %1491 = vmatpush1.msra.mxu0 %v1431
    %1492 = vmatprep.subr.mxu0 0.0
    %1493 = vmatpush1.msra.mxu0 %v1426
    %1494 = vmatprep.subr.mxu0 0.0
    %1495 = vmatpush1.msra.mxu0 %v1421
    %1496 = vmatprep.subr.mxu0 0.0
    %1497 = vmatpush1.msra.mxu0 %v1416
    %1498 = vmatprep.subr.mxu0 0.0
    %1499 = vmatpush1.msra.mxu0 %v1411
    %1500 = vmatprep.subr.mxu0 0.0
    %1501 = vmatpush1.msra.mxu0 %v1406
    %1502 = vmatprep.subr.mxu0 0.0
    %1503 = vmatpush1.msra.mxu0 %v1401
    %1504 = vmatprep.subr.mxu0 0.0
    %1505 = vmatpush1.msra.mxu0 %v1396
    %1506 = vmatprep.subr.mxu0 0.0
    %1507 = vmatpush2.msra.mxu0 0.0
    %1508 = vmatprep.subr.mxu0 0.0
    %1509 = vmatpush2.msra.mxu0 0.0
    %1510 = vmatprep.subr.mxu0 0.0
    %1511 = vmatpush2.msra.mxu0 0.0
    %1512 = vmatprep.subr.mxu0 0.0
    %1513 = vmatpush2.msra.mxu0 0.0
    %1514 = vmatprep.subr.mxu0 0.0
    %1515 = vmatpush2.msra.mxu0 0.0
    %1516 = vmatprep.subr.mxu0 0.0
    %1517 = vmatpush2.msra.mxu0 0.0
    %1518 = vmatprep.subr.mxu0 0.0
    %1519 = vmatpush2.msra.mxu0 0.0
    %1520 = vmatprep.subr.mxu0 0.0
    %1521 = vmatpush2.msra.mxu0 0.0
    %1522 = vmatprep.subr.mxu0 0.0
    %1523 = vmatpush2.msra.mxu0 0.0
    %1524 = vmatprep.subr.mxu0 0.0
    %1525 = vmatpush2.msra.mxu0 0.0
    %1526 = vmatprep.subr.mxu0 0.0
    %1527 = vmatpush2.msra.mxu0 0.0
    %1528 = vmatprep.subr.mxu0 0.0
    %1529 = vmatpush2.msra.mxu0 0.0
    %1530 = vmatprep.subr.mxu0 0.0
    %1531 = vmatpush2.msra.mxu0 0.0
    %1532 = vmatprep.subr.mxu0 0.0
    %1533 = vmatpush2.msra.mxu0 0.0
    %1534 = vmatprep.subr.mxu0 0.0
    %1535 = vmatpush2.msra.mxu0 0.0
    %1536 = vmatprep.subr.mxu0 0.0
    %1537 = vmatpush2.msra.mxu0 0.0
    %1538 = vmatprep.mubr.f32.mxu0 0.0
    %1539 = vmatmul.mubr.f32.gmra.mxu0 %v1396
    %v1540 = vpop.f32.mrf.mxu0
    %v1541 = vadd.f32 0.0, %v1540
    %v1542 = vpop.f32.mrf.mxu0
    %1543 = vmatprep.mubr.f32.mxu0 0.0
    %1544 = vmatmul.mubr.f32.gmra.mxu0 %v1401
    %v1545 = vpop.f32.mrf.mxu0
    %v1546 = vadd.f32 0.0, %v1545
    %v1547 = vpop.f32.mrf.mxu0
    %1548 = vmatprep.mubr.f32.mxu0 0.0
    %1549 = vmatmul.mubr.f32.gmra.mxu0 %v1406
    %v1550 = vpop.f32.mrf.mxu0
    %v1551 = vadd.f32 0.0, %v1550
    %v1552 = vpop.f32.mrf.mxu0
    %1553 = vmatprep.mubr.f32.mxu0 0.0
    %1554 = vmatmul.mubr.f32.gmra.mxu0 %v1411
    %v1555 = vpop.f32.mrf.mxu0
    %v1556 = vadd.f32 0.0, %v1555
    %v1557 = vpop.f32.mrf.mxu0
    %1558 = vmatprep.mubr.f32.mxu0 0.0
    %1559 = vmatmul.mubr.f32.gmra.mxu0 %v1416
    %v1560 = vpop.f32.mrf.mxu0
    %v1561 = vadd.f32 0.0, %v1560
    %v1562 = vpop.f32.mrf.mxu0
    %1563 = vmatprep.mubr.f32.mxu0 0.0
    %1564 = vmatmul.mubr.f32.gmra.mxu0 %v1421
    %v1565 = vpop.f32.mrf.mxu0
    %v1566 = vadd.f32 0.0, %v1565
    %v1567 = vpop.f32.mrf.mxu0
    %1568 = vmatprep.mubr.f32.mxu0 0.0
    %1569 = vmatmul.mubr.f32.gmra.mxu0 %v1426
    %v1570 = vpop.f32.mrf.mxu0
    %v1571 = vadd.f32 0.0, %v1570
    %v1572 = vpop.f32.mrf.mxu0
    %1573 = vmatprep.mubr.f32.mxu0 0.0
    %1574 = vmatmul.mubr.f32.gmra.mxu0 %v1431
    %v1575 = vpop.f32.mrf.mxu0
    %v1576 = vadd.f32 0.0, %v1575
    %v1577 = vpop.f32.mrf.mxu0
    %1578 = vmatprep.mubr.f32.mxu0 0.0
    %1579 = vmatmul.mubr.f32.gmra.mxu0 %v1436
    %v1580 = vpop.f32.mrf.mxu0
    %v1581 = vadd.f32 0.0, %v1580
    %v1582 = vpop.f32.mrf.mxu0
    %1583 = vmatprep.mubr.f32.mxu0 0.0
    %1584 = vmatmul.mubr.f32.gmra.mxu0 %v1441
    %v1585 = vpop.f32.mrf.mxu0
    %v1586 = vadd.f32 0.0, %v1585
    %v1587 = vpop.f32.mrf.mxu0
    %1588 = vmatprep.mubr.f32.mxu0 0.0
    %1589 = vmatmul.mubr.f32.gmra.mxu0 %v1446
    %v1590 = vpop.f32.mrf.mxu0
    %v1591 = vadd.f32 0.0, %v1590
    %v1592 = vpop.f32.mrf.mxu0
    %1593 = vmatprep.mubr.f32.mxu0 0.0
    %1594 = vmatmul.mubr.f32.gmra.mxu0 %v1451
    %v1595 = vpop.f32.mrf.mxu0
    %v1596 = vadd.f32 0.0, %v1595
    %v1597 = vpop.f32.mrf.mxu0
    %1598 = vmatprep.mubr.f32.mxu0 0.0
    %1599 = vmatmul.mubr.f32.gmra.mxu0 %v1456
    %v1600 = vpop.f32.mrf.mxu0
    %v1601 = vadd.f32 0.0, %v1600
    %v1602 = vpop.f32.mrf.mxu0
    %1603 = vmatprep.mubr.f32.mxu0 0.0
    %1604 = vmatmul.mubr.f32.gmra.mxu0 %v1461
    %v1605 = vpop.f32.mrf.mxu0
    %v1606 = vadd.f32 0.0, %v1605
    %v1607 = vpop.f32.mrf.mxu0
    %1608 = vmatprep.mubr.f32.mxu0 0.0
    %1609 = vmatmul.mubr.f32.gmra.mxu0 %v1466
    %v1610 = vpop.f32.mrf.mxu0
    %v1611 = vadd.f32 0.0, %v1610
    %v1612 = vpop.f32.mrf.mxu0
    %1613 = vmatprep.mubr.f32.mxu0 0.0
    %1614 = vmatmul.mubr.f32.gmra.mxu0 %v1471
    %v1615 = vpop.f32.mrf.mxu0
    %v1616 = vadd.f32 0.0, %v1615
    %v1617 = vpop.f32.mrf.mxu0
    %1618 = vdwg.mxu0
    %v1619 = vld [vmem:[#allocation5] sm:$0xff]
    %v1620 = vld [vmem:[#allocation5 + $0x8] sm:$0xff]
    %v1621 = vld [vmem:[#allocation5 + $0x10] sm:$0xff]
    %v1622 = vld [vmem:[#allocation5 + $0x18] sm:$0xff]
    %v1623 = vld [vmem:[#allocation5 + $0x20] sm:$0xff]
    %v1624 = vld [vmem:[#allocation5 + $0x28] sm:$0xff]
    %v1625 = vld [vmem:[#allocation5 + $0x30] sm:$0xff]
    %v1626 = vld [vmem:[#allocation5 + $0x38] sm:$0xff]
    %v1627 = vld [vmem:[#allocation5 + $0x40] sm:$0xff]
    %v1628 = vld [vmem:[#allocation5 + $0x48] sm:$0xff]
    %v1629 = vld [vmem:[#allocation5 + $0x50] sm:$0xff]
    %v1630 = vld [vmem:[#allocation5 + $0x58] sm:$0xff]
    %v1631 = vld [vmem:[#allocation5 + $0x60] sm:$0xff]
    %v1632 = vld [vmem:[#allocation5 + $0x68] sm:$0xff]
    %v1633 = vld [vmem:[#allocation5 + $0x70] sm:$0xff]
    %v1634 = vld [vmem:[#allocation5 + $0x78] sm:$0xff]
    %1635 = vmatprep.subr.mxu0 0.0
    %1636 = vmatpush1.msra.mxu0 %v1616
    %1637 = vmatprep.subr.mxu0 0.0
    %1638 = vmatpush1.msra.mxu0 %v1611
    %1639 = vmatprep.subr.mxu0 0.0
    %1640 = vmatpush1.msra.mxu0 %v1606
    %1641 = vmatprep.subr.mxu0 0.0
    %1642 = vmatpush1.msra.mxu0 %v1601
    %1643 = vmatprep.subr.mxu0 0.0
    %1644 = vmatpush1.msra.mxu0 %v1596
    %1645 = vmatprep.subr.mxu0 0.0
    %1646 = vmatpush1.msra.mxu0 %v1591
    %1647 = vmatprep.subr.mxu0 0.0
    %1648 = vmatpush1.msra.mxu0 %v1586
    %1649 = vmatprep.subr.mxu0 0.0
    %1650 = vmatpush1.msra.mxu0 %v1581
    %1651 = vmatprep.subr.mxu0 0.0
    %1652 = vmatpush1.msra.mxu0 %v1576
    %1653 = vmatprep.subr.mxu0 0.0
    %1654 = vmatpush1.msra.mxu0 %v1571
    %1655 = vmatprep.subr.mxu0 0.0
    %1656 = vmatpush1.msra.mxu0 %v1566
    %1657 = vmatprep.subr.mxu0 0.0
    %1658 = vmatpush1.msra.mxu0 %v1561
    %1659 = vmatprep.subr.mxu0 0.0
    %1660 = vmatpush1.msra.mxu0 %v1556
    %1661 = vmatprep.subr.mxu0 0.0
    %1662 = vmatpush1.msra.mxu0 %v1551
    %1663 = vmatprep.subr.mxu0 0.0
    %1664 = vmatpush1.msra.mxu0 %v1546
    %1665 = vmatprep.subr.mxu0 0.0
    %1666 = vmatpush1.msra.mxu0 %v1541
    %1667 = vmatprep.subr.mxu0 0.0
    %1668 = vmatpush2.msra.mxu0 0.0
    %1669 = vmatprep.subr.mxu0 0.0
    %1670 = vmatpush2.msra.mxu0 0.0
    %1671 = vmatprep.subr.mxu0 0.0
    %1672 = vmatpush2.msra.mxu0 0.0
    %1673 = vmatprep.subr.mxu0 0.0
    %1674 = vmatpush2.msra.mxu0 0.0
    %1675 = vmatprep.subr.mxu0 0.0
    %1676 = vmatpush2.msra.mxu0 0.0
    %1677 = vmatprep.subr.mxu0 0.0
    %1678 = vmatpush2.msra.mxu0 0.0
    %1679 = vmatprep.subr.mxu0 0.0
    %1680 = vmatpush2.msra.mxu0 0.0
    %1681 = vmatprep.subr.mxu0 0.0
    %1682 = vmatpush2.msra.mxu0 0.0
    %1683 = vmatprep.subr.mxu0 0.0
    %1684 = vmatpush2.msra.mxu0 0.0
    %1685 = vmatprep.subr.mxu0 0.0
    %1686 = vmatpush2.msra.mxu0 0.0
    %1687 = vmatprep.subr.mxu0 0.0
    %1688 = vmatpush2.msra.mxu0 0.0
    %1689 = vmatprep.subr.mxu0 0.0
    %1690 = vmatpush2.msra.mxu0 0.0
    %1691 = vmatprep.subr.mxu0 0.0
    %1692 = vmatpush2.msra.mxu0 0.0
    %1693 = vmatprep.subr.mxu0 0.0
    %1694 = vmatpush2.msra.mxu0 0.0
    %1695 = vmatprep.subr.mxu0 0.0
    %1696 = vmatpush2.msra.mxu0 0.0
    %1697 = vmatprep.subr.mxu0 0.0
    %1698 = vmatpush2.msra.mxu0 0.0
    %1699 = vmatprep.mubr.f32.mxu0 0.0
    %1700 = vmatmul.mubr.f32.gmra.mxu0 %v1619
    %v1701 = vpop.f32.mrf.mxu0
    %v1702 = vadd.f32 0.0, %v1701
    %v1703 = vpop.f32.mrf.mxu0
    %1704 = vmatprep.mubr.f32.mxu0 0.0
    %1705 = vmatmul.mubr.f32.gmra.mxu0 %v1620
    %v1706 = vpop.f32.mrf.mxu0
    %v1707 = vadd.f32 0.0, %v1706
    %v1708 = vpop.f32.mrf.mxu0
    %1709 = vmatprep.mubr.f32.mxu0 0.0
    %1710 = vmatmul.mubr.f32.gmra.mxu0 %v1621
    %v1711 = vpop.f32.mrf.mxu0
    %v1712 = vadd.f32 0.0, %v1711
    %v1713 = vpop.f32.mrf.mxu0
    %1714 = vmatprep.mubr.f32.mxu0 0.0
    %1715 = vmatmul.mubr.f32.gmra.mxu0 %v1622
    %v1716 = vpop.f32.mrf.mxu0
    %v1717 = vadd.f32 0.0, %v1716
    %v1718 = vpop.f32.mrf.mxu0
    %1719 = vmatprep.mubr.f32.mxu0 0.0
    %1720 = vmatmul.mubr.f32.gmra.mxu0 %v1623
    %v1721 = vpop.f32.mrf.mxu0
    %v1722 = vadd.f32 0.0, %v1721
    %v1723 = vpop.f32.mrf.mxu0
    %1724 = vmatprep.mubr.f32.mxu0 0.0
    %1725 = vmatmul.mubr.f32.gmra.mxu0 %v1624
    %v1726 = vpop.f32.mrf.mxu0
    %v1727 = vadd.f32 0.0, %v1726
    %v1728 = vpop.f32.mrf.mxu0
    %1729 = vmatprep.mubr.f32.mxu0 0.0
    %1730 = vmatmul.mubr.f32.gmra.mxu0 %v1625
    %v1731 = vpop.f32.mrf.mxu0
    %v1732 = vadd.f32 0.0, %v1731
    %v1733 = vpop.f32.mrf.mxu0
    %1734 = vmatprep.mubr.f32.mxu0 0.0
    %1735 = vmatmul.mubr.f32.gmra.mxu0 %v1626
    %v1736 = vpop.f32.mrf.mxu0
    %v1737 = vadd.f32 0.0, %v1736
    %v1738 = vpop.f32.mrf.mxu0
    %1739 = vmatprep.mubr.f32.mxu0 0.0
    %1740 = vmatmul.mubr.f32.gmra.mxu0 %v1627
    %v1741 = vpop.f32.mrf.mxu0
    %v1742 = vadd.f32 0.0, %v1741
    %v1743 = vpop.f32.mrf.mxu0
    %1744 = vmatprep.mubr.f32.mxu0 0.0
    %1745 = vmatmul.mubr.f32.gmra.mxu0 %v1628
    %v1746 = vpop.f32.mrf.mxu0
    %v1747 = vadd.f32 0.0, %v1746
    %v1748 = vpop.f32.mrf.mxu0
    %1749 = vmatprep.mubr.f32.mxu0 0.0
    %1750 = vmatmul.mubr.f32.gmra.mxu0 %v1629
    %v1751 = vpop.f32.mrf.mxu0
    %v1752 = vadd.f32 0.0, %v1751
    %v1753 = vpop.f32.mrf.mxu0
    %1754 = vmatprep.mubr.f32.mxu0 0.0
    %1755 = vmatmul.mubr.f32.gmra.mxu0 %v1630
    %v1756 = vpop.f32.mrf.mxu0
    %v1757 = vadd.f32 0.0, %v1756
    %v1758 = vpop.f32.mrf.mxu0
    %1759 = vmatprep.mubr.f32.mxu0 0.0
    %1760 = vmatmul.mubr.f32.gmra.mxu0 %v1631
    %v1761 = vpop.f32.mrf.mxu0
    %v1762 = vadd.f32 0.0, %v1761
    %v1763 = vpop.f32.mrf.mxu0
    %1764 = vmatprep.mubr.f32.mxu0 0.0
    %1765 = vmatmul.mubr.f32.gmra.mxu0 %v1632
    %v1766 = vpop.f32.mrf.mxu0
    %v1767 = vadd.f32 0.0, %v1766
    %v1768 = vpop.f32.mrf.mxu0
    %1769 = vmatprep.mubr.f32.mxu0 0.0
    %1770 = vmatmul.mubr.f32.gmra.mxu0 %v1633
    %v1771 = vpop.f32.mrf.mxu0
    %v1772 = vadd.f32 0.0, %v1771
    %v1773 = vpop.f32.mrf.mxu0
    %1774 = vmatprep.mubr.f32.mxu0 0.0
    %1775 = vmatmul.mubr.f32.gmra.mxu0 %v1634
    %v1776 = vpop.f32.mrf.mxu0
    %v1777 = vadd.f32 0.0, %v1776
    %v1778 = vpop.f32.mrf.mxu0
    %1779 = vdwg.mxu0
    %1780 = vst [vmem:[#allocation7] sm:$0xff] %v1702
    %1781 = vst [vmem:[#allocation7 + $0x8] sm:$0xff] %v1707
    %1782 = vst [vmem:[#allocation7 + $0x10] sm:$0xff] %v1712
    %1783 = vst [vmem:[#allocation7 + $0x18] sm:$0xff] %v1717
    %1784 = vst [vmem:[#allocation7 + $0x20] sm:$0xff] %v1722
    %1785 = vst [vmem:[#allocation7 + $0x28] sm:$0xff] %v1727
    %1786 = vst [vmem:[#allocation7 + $0x30] sm:$0xff] %v1732
    %1787 = vst [vmem:[#allocation7 + $0x38] sm:$0xff] %v1737
    %1788 = vst [vmem:[#allocation7 + $0x40] sm:$0xff] %v1742
    %1789 = vst [vmem:[#allocation7 + $0x48] sm:$0xff] %v1747
    %1790 = vst [vmem:[#allocation7 + $0x50] sm:$0xff] %v1752
    %1791 = vst [vmem:[#allocation7 + $0x58] sm:$0xff] %v1757
    %1792 = vst [vmem:[#allocation7 + $0x60] sm:$0xff] %v1762
    %1793 = vst [vmem:[#allocation7 + $0x68] sm:$0xff] %v1767
    %1794 = vst [vmem:[#allocation7 + $0x70] sm:$0xff] %v1772
    %1795 = vst [vmem:[#allocation7 + $0x78] sm:$0xff] %v1777
    // Predicated region
    $region18: #{tpu_custom_call.1} parent=1 // pred_check
      _
    $region19: #{tpu_custom_call.1} parent=1 // pred_check_branch
      %1797 = sbr.rel (0) target = $region21
    $region20: #{tpu_custom_call.1} parent=1 // pred_region
      %s1799 = ssub.s32 2048, 2048
      %1800 = vsyncadd [#allocation4], %s1799
      %s1801 = sshll.u32 [#allocation7], 4
      %s1802 = int_to_ptr.vmem [resolvable:$true] %s1801
      %1807 = dma.vmem_to_hbm [thread:$0]  %s1802, 2048, %s2, [#allocation4], 128, 128, 8
    $region21: #{tpu_custom_call.1} parent=1 // pred_fallthru
      _
    // Predicated region
    $region22: #{tpu_custom_call.1} parent=1 // pred_check
      _
    $region23: #{tpu_custom_call.1} parent=1 // pred_check_branch
      %1809 = sbr.rel (0) target = $region25
    $region24: #{tpu_custom_call.1} parent=1 // pred_region
      %1810 = dma.done [#allocation4], 2048
    $region25: #{tpu_custom_call.1} parent=1 // pred_fallthru
      _
    %1811 = vsyncpa [#allocation3], 1
    %1812 = vsyncpa [#allocation6], 1
    %1813 = vsyncpa [#allocation4], 1

</llo_original>
